<compile_context>
chip_gen: v7x
topology: tpu7x:2x2x1
jax: 0.10.0
libtpu: 0.0.40
codegen_flags: <defaults>
</compile_context>

<pallas_src>
import functools

import jax
import jax.numpy as jnp
from jax.experimental import pallas as pl
from jax.experimental.pallas import tpu as pltpu


def _node_mlp_kernel(x_ref, win_ref, bin_ref, wc_ref, bc_ref, z0_ref, p_ref):
    # x_ref : (TILE_N, in_feats)   win_ref : (in_feats, H)   bin_ref : (1, H)
    # wc_ref: (H, 2H) = [Wc0 | Wc1]   bc_ref : (1, 2H) = [b_c | 0]
    # z0_ref: (TILE_N, H) = ReLU(x@W_in+b_in) @ Wc0 + b_c
    # p_ref : (TILE_N, H) = ReLU(x@W_in+b_in) @ Wc1
    h0 = jnp.dot(x_ref[...], win_ref[...],
                 preferred_element_type=jnp.float32) + bin_ref[...]
    h0 = jnp.maximum(h0, 0.0)  # ReLU
    # TODO(synk): dropout_rate=0 -> identity; training-mode dropout not implemented.
    zp = jnp.dot(h0, wc_ref[...], preferred_element_type=jnp.float32) + bc_ref[...]
    h = z0_ref.shape[1]
    z0_ref[...] = zp[:, :h]
    p_ref[...] = zp[:, h:]


def _cheb_spmm_out_kernel(nnz_ref, blk_ref, a_ref, p_ref, z0_ref, wout_ref,
                          bout_ref, out_ref, acc_ref):
    # Grid: (row tiles [parallel], nonzero-block steps [arbitrary, last]).
    # nnz_ref : (n_row,) SMEM       count of nonzero k-blocks for this row tile
    # blk_ref : (n_row, n_k) SMEM   compacted k-block indices (padded w/ last idx)
    # a_ref   : (TILE_N, TILE_K)    bf16 block of A_hat (data-dependent index_map)
    # p_ref   : (N, H)              f32, fully VMEM-resident P = H0 @ Wc1
    # acc_ref : (TILE_N, H)         f32 VMEM accumulator of A_hat @ P
    i = pl.program_id(0)
    s = pl.program_id(1)
    tile_k = a_ref.shape[1]

    @pl.when(s == 0)
    def _init():
        acc_ref[...] = jnp.zeros_like(acc_ref)

    @pl.when(s < nnz_ref[i])
    def _accumulate():
        kblk = blk_ref[i, s]
        start = pl.multiple_of(kblk * tile_k, tile_k)
        p_blk = p_ref[pl.ds(start, tile_k), :]
        acc_ref[...] += jnp.dot(a_ref[...].astype(jnp.float32), p_blk,
                                preferred_element_type=jnp.float32)

    @pl.when(s == pl.num_programs(1) - 1)
    def _finalize():
        # T1 = -A_hat @ H0  =>  T1 @ Wc1 = -acc.  ChebConv activation = ReLU.
        hc = jnp.maximum(z0_ref[...] - acc_ref[...], 0.0)
        out_ref[...] = (jnp.dot(hc, wout_ref[...],
                                preferred_element_type=jnp.float32)
                        + bout_ref[...]).astype(out_ref.dtype)


@functools.partial(jax.jit, static_argnames=("tile_n", "tile_k"))
def chebnet_forward(x, a_hat, w_in, b_in, wc0, wc1, b_c, w_out, b_out,
                    *, tile_n=256, tile_k=512):
    N, in_feats = x.shape
    H = w_in.shape[1]
    C = w_out.shape[1]
    assert a_hat.shape == (N, N)

    tile_n = min(tile_n, N)
    tile_k = min(tile_k, N)
    # TODO(synk): no ragged-edge handling; N must divide evenly into the tiles.
    assert N % tile_n == 0 and N % tile_k == 0
    assert tile_n % 8 == 0, "sublane constraint (16 preferred for bf16 A_hat)"
    assert tile_k % 128 == 0 or tile_k == N, "lane constraint on A_hat blocks"

    n_row = N // tile_n
    n_k = N // tile_k

    b_in2 = b_in.reshape(1, H)
    b_out2 = b_out.reshape(1, C)
    # Merged ChebConv projection: one (H, 2H) weight, b_c folded into the Z0 half.
    wc_cat = jnp.concatenate([wc0, wc1], axis=1)                    # (H, 2H)
    bc_cat = jnp.concatenate([b_c, jnp.zeros_like(b_c)]).reshape(1, 2 * H)

    # bf16 adjacency: halves the dominant HBM stream; accumulation stays f32.
    a_bf16 = a_hat.astype(jnp.bfloat16)

    # ---- Block-sparsity schedule (graph-structure only; amortizable). --------
    blocks = a_hat.reshape(n_row, tile_n, n_k, tile_k)
    mask = (blocks != 0).any(axis=(1, 3))                            # (n_row, n_k)
    nnz = mask.sum(axis=1).astype(jnp.int32)                         # (n_row,)
    order = jnp.argsort(jnp.logical_not(mask), axis=1,
                        stable=True).astype(jnp.int32)               # nonzero first
    pos = jnp.minimum(jnp.arange(n_k, dtype=jnp.int32)[None, :],
                      jnp.maximum(nnz - 1, 0)[:, None])
    blk = jnp.take_along_axis(order, pos, axis=1)                    # (n_row, n_k)

    # ---- Stage 1: fused input_linear + ReLU + merged ChebConv projections. ---
    z0, p = pl.pallas_call(
        _node_mlp_kernel,
        out_shape=(jax.ShapeDtypeStruct((N, H), jnp.float32),
                   jax.ShapeDtypeStruct((N, H), jnp.float32)),
        grid_spec=pltpu.PrefetchScalarGridSpec(
            num_scalar_prefetch=0,
            grid=(n_row,),
            in_specs=[
                pl.BlockSpec((tile_n, in_feats), lambda i: (i, 0)),   # x
                pl.BlockSpec((in_feats, H), lambda i: (0, 0)),        # W_in
                pl.BlockSpec((1, H), lambda i: (0, 0)),               # b_in
                pl.BlockSpec((H, 2 * H), lambda i: (0, 0)),           # [Wc0|Wc1]
                pl.BlockSpec((1, 2 * H), lambda i: (0, 0)),           # [b_c|0]
            ],
            out_specs=[pl.BlockSpec((tile_n, H), lambda i: (i, 0)),   # Z0
                       pl.BlockSpec((tile_n, H), lambda i: (i, 0))],  # P
        ),
        compiler_params=pltpu.CompilerParams(
            dimension_semantics=("parallel",)),
    )(x, w_in, b_in2, wc_cat, bc_cat)

    # TODO(synk): full fusion of stage 1 into stage 2 (recomputing P per
    # k-block from x) would remove this N x 2H HBM round-trip entirely.

    # ---- Stage 2: block-sparse A_hat @ P + ReLU + output_linear epilogue. ----
    out = pl.pallas_call(
        _cheb_spmm_out_kernel,
        out_shape=jax.ShapeDtypeStruct((N, C), jnp.float32),
        grid_spec=pltpu.PrefetchScalarGridSpec(
            num_scalar_prefetch=2,                                    # nnz, blk
            grid=(n_row, n_k),
            in_specs=[
                # A_hat block, data-dependent k-block index (skips zero blocks;
                # padded steps repeat the previous index -> DMA elided).
                pl.BlockSpec((tile_n, tile_k),
                             lambda i, s, nb, bb: (i, bb[i, s])),
                # P fully resident in VMEM, fetched once.
                pl.BlockSpec((N, H), lambda i, s, nb, bb: (0, 0)),
                pl.BlockSpec((tile_n, H), lambda i, s, nb, bb: (i, 0)),  # Z0
                pl.BlockSpec((H, C), lambda i, s, nb, bb: (0, 0)),       # W_out
                pl.BlockSpec((1, C), lambda i, s, nb, bb: (0, 0)),       # b_out
            ],
            out_specs=pl.BlockSpec((tile_n, C), lambda i, s, nb, bb: (i, 0)),
            scratch_shapes=[pltpu.VMEM((tile_n, H), jnp.float32)],
        ),
        compiler_params=pltpu.CompilerParams(
            dimension_semantics=("parallel", "arbitrary"),
            vmem_limit_bytes=32 * 1024 * 1024),
    )(nnz, blk, a_bf16, p, z0, w_out, b_out2)
    return out


def _reference(x, a_hat, w_in, b_in, wc0, wc1, b_c, w_out, b_out):
    hp = jax.lax.Precision.HIGHEST
    h0 = jax.nn.relu(jnp.dot(x, w_in, precision=hp) + b_in)
    t1 = -jnp.dot(a_hat, h0, precision=hp)            # ChebConv, lambda_max=[2]
    hc = jax.nn.relu(jnp.dot(h0, wc0, precision=hp)
                     + jnp.dot(t1, wc1, precision=hp) + b_c)
    return jnp.dot(hc, w_out, precision=hp) + b_out


if __name__ == "__main__":
    key = jax.random.PRNGKey(0)
    N, in_feats, h_feats, num_classes = 256, 16, 32, 2
    keys = jax.random.split(key, 10)

    # Node features.
    x = jax.random.normal(keys[0], (N, in_feats), dtype=jnp.float32)

    # Random directed graph as a dense adjacency: A[v, u] = 1 iff edge (u -> v).
    # TODO(synk): DGL's sparse update_all(copy_u, sum) is realized as a dense
    # normalized-adjacency block-sparse matmul; a true edge-list SpMM would
    # need a manual DMA gather kernel.
    adj = (jax.random.uniform(keys[1], (N, N)) < 0.05).astype(jnp.float32)
    in_deg = jnp.maximum(adj.sum(axis=1), 1.0)             # clamp(min=1)
    d_invsqrt = 1.0 / jnp.sqrt(in_deg)
    a_hat = d_invsqrt[:, None] * adj * d_invsqrt[None, :]  # D^-1/2 A D^-1/2

    def linear_init(kw, kb, fan_in, fan_out):
        bound = 1.0 / (fan_in ** 0.5)
        w = jax.random.uniform(kw, (fan_in, fan_out), minval=-bound,
                               maxval=bound, dtype=jnp.float32)
        b = jax.random.uniform(kb, (fan_out,), minval=-bound, maxval=bound,
                               dtype=jnp.float32)
        return w, b

    w_in, b_in = linear_init(keys[2], keys[3], in_feats, h_feats)
    # ChebConv(K=2) Linear(2H -> H): stored pre-split as two (H, H) slices.
    wc_full, b_c = linear_init(keys[4], keys[5], 2 * h_feats, h_feats)
    wc0, wc1 = wc_full[:h_feats], wc_full[h_feats:]
    w_out, b_out = linear_init(keys[6], keys[7], h_feats, num_classes)

    out = chebnet_forward(x, a_hat, w_in, b_in, wc0, wc1, b_c, w_out, b_out)
    out = jax.block_until_ready(out)

    ref = _reference(x, a_hat, w_in, b_in, wc0, wc1, b_c, w_out, b_out)
    assert out.shape == (N, num_classes)
    # Tolerance covers bf16 quantization of A_hat (accumulation is f32).
    assert jnp.allclose(out, ref, atol=3e-3, rtol=3e-3), (out, ref)

    print("KERNEL_OK")
</pallas_src>

<mosaic_0001>
module attributes {stable_mosaic.version = 11 : i64} {
  func.func @_cheb_spmm_out_kernel(%arg0: i32, %arg1: i32, %arg2: memref<1xi32, #tpu.memory_space<smem>>, %arg3: memref<1x1xi32, #tpu.memory_space<smem>>, %arg4: memref<256x256xbf16, #tpu.memory_space<vmem>>, %arg5: memref<256x32xf32, #tpu.memory_space<vmem>>, %arg6: memref<256x32xf32, #tpu.memory_space<vmem>>, %arg7: memref<32x2xf32, #tpu.memory_space<vmem>>, %arg8: memref<1x2xf32, #tpu.memory_space<vmem>>, %arg9: memref<256x2xf32, #tpu.memory_space<vmem>>, %arg10: memref<256x32xf32, #tpu.memory_space<vmem>>) attributes {dimension_semantics = [#tpu.dimension_semantics<parallel>, #tpu.dimension_semantics<arbitrary>], iteration_bounds = array<i64: 1, 1>, scalar_prefetch = 2 : i64, scratch_operands = 1 : i64, tpu.core_type = #tpu.core_type<tc>, window_params = [{transform_indices = @transform_0, window_bounds = array<i64: 256, 256>}, {pipeline_mode = #tpu.pipeline_mode<synchronous>, transform_indices = @transform_1, window_bounds = array<i64: 256, 32>}, {transform_indices = @transform_2, window_bounds = array<i64: 256, 32>}, {pipeline_mode = #tpu.pipeline_mode<synchronous>, transform_indices = @transform_3, window_bounds = array<i64: 32, 2>}, {pipeline_mode = #tpu.pipeline_mode<synchronous>, transform_indices = @transform_4, window_bounds = array<i64: 1, 2>}, {transform_indices = @transform_5, window_bounds = array<i64: 256, 2>}]} {
    %c0_i32 = arith.constant 0 : i32
    %0 = arith.cmpi eq, %arg1, %c0_i32 : i32
    %1 = arith.extui %0 : i1 to i32
    %c0_i32_0 = arith.constant 0 : i32
    %2 = arith.cmpi ne, %1, %c0_i32_0 : i32
    scf.if %2 {
      %cst = arith.constant 0.000000e+00 : f32
      %11 = vector.broadcast %cst : f32 to vector<256x32xf32>
      %c0 = arith.constant 0 : index
      %c0_4 = arith.constant 0 : index
      %12 = vector.load %arg10[%c0, %c0_4] : memref<256x32xf32, #tpu.memory_space<vmem>>, vector<256x32xf32>
      tpu.vector_store %arg10[%c0, %c0_4], %11 {strides = array<i32>} : memref<256x32xf32, #tpu.memory_space<vmem>>, vector<256x32xf32>,
    } else {
    }
    %3 = arith.index_cast %arg0 : i32 to index
    %4 = memref.load %arg2[%3] : memref<1xi32, #tpu.memory_space<smem>>
    %5 = arith.cmpi slt, %arg1, %4 : i32
    %6 = arith.extui %5 : i1 to i32
    %c0_i32_1 = arith.constant 0 : i32
    %7 = arith.cmpi ne, %6, %c0_i32_1 : i32
    scf.if %7 {
      %11 = arith.index_cast %arg0 : i32 to index
      %12 = arith.index_cast %arg1 : i32 to index
      %13 = memref.load %arg3[%11, %12] : memref<1x1xi32, #tpu.memory_space<smem>>
      %c256_i32 = arith.constant 256 : i32
      %14 = arith.muli %13, %c256_i32 : i32
      %15 = tpu.assume_multiple %14, 256 : i32
      %16 = arith.index_cast %15 : i32 to index
      %c0 = arith.constant 0 : index
      %17 = vector.load %arg5[%16, %c0] : memref<256x32xf32, #tpu.memory_space<vmem>>, vector<256x32xf32>
      %c0_4 = arith.constant 0 : index
      %c0_5 = arith.constant 0 : index
      %18 = vector.load %arg10[%c0_4, %c0_5] : memref<256x32xf32, #tpu.memory_space<vmem>>, vector<256x32xf32>
      %c0_6 = arith.constant 0 : index
      %c0_7 = arith.constant 0 : index
      %19 = vector.load %arg4[%c0_6, %c0_7] : memref<256x256xbf16, #tpu.memory_space<vmem>>, vector<256x256xbf16>
      %20 = arith.extf %19 : vector<256x256xbf16> to vector<256x256xf32>
      %cst = arith.constant dense<0.000000e+00> : vector<256x32xf32>
      %21 = tpu.matmul %20, %17, %cst {dimension_numbers = #tpu.dot_dimension_numbers<[1], [0], [0], [1], [0, 0, 1, 1], [], []>} : vector<256x256xf32>, vector<256x32xf32>, vector<256x32xf32> -> vector<256x32xf32>
      %22 = arith.addf %18, %21 : vector<256x32xf32>
      %c0_8 = arith.constant 0 : index
      %c0_9 = arith.constant 0 : index
      %23 = vector.load %arg10[%c0_8, %c0_9] : memref<256x32xf32, #tpu.memory_space<vmem>>, vector<256x32xf32>
      tpu.vector_store %arg10[%c0_8, %c0_9], %22 {strides = array<i32>} : memref<256x32xf32, #tpu.memory_space<vmem>>, vector<256x32xf32>,
    } else {
    }
    %c0_i32_2 = arith.constant 0 : i32
    %8 = arith.cmpi eq, %arg1, %c0_i32_2 : i32
    %9 = arith.extui %8 : i1 to i32
    %c0_i32_3 = arith.constant 0 : i32
    %10 = arith.cmpi ne, %9, %c0_i32_3 : i32
    scf.if %10 {
      %c0 = arith.constant 0 : index
      %c0_4 = arith.constant 0 : index
      %11 = vector.load %arg6[%c0, %c0_4] : memref<256x32xf32, #tpu.memory_space<vmem>>, vector<256x32xf32>
      %c0_5 = arith.constant 0 : index
      %c0_6 = arith.constant 0 : index
      %12 = vector.load %arg10[%c0_5, %c0_6] : memref<256x32xf32, #tpu.memory_space<vmem>>, vector<256x32xf32>
      %13 = arith.subf %11, %12 : vector<256x32xf32>
      %cst = arith.constant 0.000000e+00 : f32
      %14 = vector.broadcast %cst : f32 to vector<256x32xf32>
      %15 = arith.maximumf %13, %14 : vector<256x32xf32>
      %c0_7 = arith.constant 0 : index
      %c0_8 = arith.constant 0 : index
      %16 = vector.load %arg7[%c0_7, %c0_8] : memref<32x2xf32, #tpu.memory_space<vmem>>, vector<32x2xf32>
      %cst_9 = arith.constant dense<0.000000e+00> : vector<256x2xf32>
      %17 = tpu.matmul %15, %16, %cst_9 {dimension_numbers = #tpu.dot_dimension_numbers<[1], [0], [0], [1], [0, 0, 1, 1], [], []>} : vector<256x32xf32>, vector<32x2xf32>, vector<256x2xf32> -> vector<256x2xf32>
      %c0_10 = arith.constant 0 : index
      %c0_11 = arith.constant 0 : index
      %18 = vector.load %arg8[%c0_10, %c0_11] : memref<1x2xf32, #tpu.memory_space<vmem>>, vector<1x2xf32>
      %19 = vector.broadcast %18 : vector<1x2xf32> to vector<256x2xf32>
      %20 = arith.addf %17, %19 : vector<256x2xf32>
      %c0_12 = arith.constant 0 : index
      %c0_13 = arith.constant 0 : index
      %21 = vector.load %arg9[%c0_12, %c0_13] : memref<256x2xf32, #tpu.memory_space<vmem>>, vector<256x2xf32>
      tpu.vector_store %arg9[%c0_12, %c0_13], %20 {strides = array<i32>} : memref<256x2xf32, #tpu.memory_space<vmem>>, vector<256x2xf32>,
    } else {
    }
    return
  }
  func.func @transform_0(%arg0: i32, %arg1: i32, %arg2: memref<1xi32, #tpu.memory_space<smem>>, %arg3: memref<1x1xi32, #tpu.memory_space<smem>>) -> (i32, i32) {
    %0 = arith.index_cast %arg0 : i32 to index
    %1 = arith.index_cast %arg1 : i32 to index
    %2 = memref.load %arg3[%0, %1] : memref<1x1xi32, #tpu.memory_space<smem>>
    %c0_i32 = arith.constant 0 : i32
    return %arg0, %2 : i32, i32
  }
  func.func @transform_1(%arg0: i32, %arg1: i32, %arg2: memref<1xi32, #tpu.memory_space<smem>>, %arg3: memref<1x1xi32, #tpu.memory_space<smem>>) -> (i32, i32) {
    %c0_i32 = arith.constant 0 : i32
    %c0_i32_0 = arith.constant 0 : i32
    %c0_i32_1 = arith.constant 0 : i32
    return %c0_i32, %c0_i32_0 : i32, i32
  }
  func.func @transform_2(%arg0: i32, %arg1: i32, %arg2: memref<1xi32, #tpu.memory_space<smem>>, %arg3: memref<1x1xi32, #tpu.memory_space<smem>>) -> (i32, i32) {
    %c0_i32 = arith.constant 0 : i32
    %c0_i32_0 = arith.constant 0 : i32
    return %arg0, %c0_i32 : i32, i32
  }
  func.func @transform_3(%arg0: i32, %arg1: i32, %arg2: memref<1xi32, #tpu.memory_space<smem>>, %arg3: memref<1x1xi32, #tpu.memory_space<smem>>) -> (i32, i32) {
    %c0_i32 = arith.constant 0 : i32
    %c0_i32_0 = arith.constant 0 : i32
    %c0_i32_1 = arith.constant 0 : i32
    return %c0_i32, %c0_i32_0 : i32, i32
  }
  func.func @transform_4(%arg0: i32, %arg1: i32, %arg2: memref<1xi32, #tpu.memory_space<smem>>, %arg3: memref<1x1xi32, #tpu.memory_space<smem>>) -> (i32, i32) {
    %c0_i32 = arith.constant 0 : i32
    %c0_i32_0 = arith.constant 0 : i32
    %c0_i32_1 = arith.constant 0 : i32
    return %c0_i32, %c0_i32_0 : i32, i32
  }
  func.func @transform_5(%arg0: i32, %arg1: i32, %arg2: memref<1xi32, #tpu.memory_space<smem>>, %arg3: memref<1x1xi32, #tpu.memory_space<smem>>) -> (i32, i32) {
    %c0_i32 = arith.constant 0 : i32
    %c0_i32_0 = arith.constant 0 : i32
    return %arg0, %c0_i32 : i32, i32
  }
}

module attributes {stable_mosaic.version = 11 : i64} {
  func.func @_node_mlp_kernel(%arg0: i32, %arg1: memref<256x16xf32, #tpu.memory_space<vmem>>, %arg2: memref<16x32xf32, #tpu.memory_space<vmem>>, %arg3: memref<1x32xf32, #tpu.memory_space<vmem>>, %arg4: memref<32x64xf32, #tpu.memory_space<vmem>>, %arg5: memref<1x64xf32, #tpu.memory_space<vmem>>, %arg6: memref<256x32xf32, #tpu.memory_space<vmem>>, %arg7: memref<256x32xf32, #tpu.memory_space<vmem>>) attributes {dimension_semantics = [#tpu.dimension_semantics<parallel>], iteration_bounds = array<i64: 1>, scalar_prefetch = 0 : i64, scratch_operands = 0 : i64, tpu.core_type = #tpu.core_type<tc>, window_params = [{transform_indices = @transform_0, window_bounds = array<i64: 256, 16>}, {pipeline_mode = #tpu.pipeline_mode<synchronous>, transform_indices = @transform_1, window_bounds = array<i64: 16, 32>}, {pipeline_mode = #tpu.pipeline_mode<synchronous>, transform_indices = @transform_2, window_bounds = array<i64: 1, 32>}, {pipeline_mode = #tpu.pipeline_mode<synchronous>, transform_indices = @transform_3, window_bounds = array<i64: 32, 64>}, {pipeline_mode = #tpu.pipeline_mode<synchronous>, transform_indices = @transform_4, window_bounds = array<i64: 1, 64>}, {transform_indices = @transform_5, window_bounds = array<i64: 256, 32>}, {transform_indices = @transform_6, window_bounds = array<i64: 256, 32>}]} {
    %c0 = arith.constant 0 : index
    %c0_0 = arith.constant 0 : index
    %0 = vector.load %arg1[%c0, %c0_0] : memref<256x16xf32, #tpu.memory_space<vmem>>, vector<256x16xf32>
    %c0_1 = arith.constant 0 : index
    %c0_2 = arith.constant 0 : index
    %1 = vector.load %arg2[%c0_1, %c0_2] : memref<16x32xf32, #tpu.memory_space<vmem>>, vector<16x32xf32>
    %cst = arith.constant dense<0.000000e+00> : vector<256x32xf32>
    %2 = tpu.matmul %0, %1, %cst {dimension_numbers = #tpu.dot_dimension_numbers<[1], [0], [0], [1], [0, 0, 1, 1], [], []>} : vector<256x16xf32>, vector<16x32xf32>, vector<256x32xf32> -> vector<256x32xf32>
    %c0_3 = arith.constant 0 : index
    %c0_4 = arith.constant 0 : index
    %3 = vector.load %arg3[%c0_3, %c0_4] : memref<1x32xf32, #tpu.memory_space<vmem>>, vector<1x32xf32>
    %4 = vector.broadcast %3 : vector<1x32xf32> to vector<256x32xf32>
    %5 = arith.addf %2, %4 : vector<256x32xf32>
    %cst_5 = arith.constant 0.000000e+00 : f32
    %6 = vector.broadcast %cst_5 : f32 to vector<256x32xf32>
    %7 = arith.maximumf %5, %6 : vector<256x32xf32>
    %c0_6 = arith.constant 0 : index
    %c0_7 = arith.constant 0 : index
    %8 = vector.load %arg4[%c0_6, %c0_7] : memref<32x64xf32, #tpu.memory_space<vmem>>, vector<32x64xf32>
    %cst_8 = arith.constant dense<0.000000e+00> : vector<256x64xf32>
    %9 = tpu.matmul %7, %8, %cst_8 {dimension_numbers = #tpu.dot_dimension_numbers<[1], [0], [0], [1], [0, 0, 1, 1], [], []>} : vector<256x32xf32>, vector<32x64xf32>, vector<256x64xf32> -> vector<256x64xf32>
    %c0_9 = arith.constant 0 : index
    %c0_10 = arith.constant 0 : index
    %10 = vector.load %arg5[%c0_9, %c0_10] : memref<1x64xf32, #tpu.memory_space<vmem>>, vector<1x64xf32>
    %11 = vector.broadcast %10 : vector<1x64xf32> to vector<256x64xf32>
    %12 = arith.addf %9, %11 : vector<256x64xf32>
    %13 = vector.extract_strided_slice %12 {offsets = [0, 0], sizes = [256, 32], strides = [1, 1]} : vector<256x64xf32> to vector<256x32xf32>
    %c0_11 = arith.constant 0 : index
    %c0_12 = arith.constant 0 : index
    %14 = vector.load %arg6[%c0_11, %c0_12] : memref<256x32xf32, #tpu.memory_space<vmem>>, vector<256x32xf32>
    tpu.vector_store %arg6[%c0_11, %c0_12], %13 {strides = array<i32>} : memref<256x32xf32, #tpu.memory_space<vmem>>, vector<256x32xf32>,
    %15 = vector.extract_strided_slice %12 {offsets = [0, 32], sizes = [256, 32], strides = [1, 1]} : vector<256x64xf32> to vector<256x32xf32>
    %c0_13 = arith.constant 0 : index
    %c0_14 = arith.constant 0 : index
    %16 = vector.load %arg7[%c0_13, %c0_14] : memref<256x32xf32, #tpu.memory_space<vmem>>, vector<256x32xf32>
    tpu.vector_store %arg7[%c0_13, %c0_14], %15 {strides = array<i32>} : memref<256x32xf32, #tpu.memory_space<vmem>>, vector<256x32xf32>,
    return
  }
  func.func @transform_0(%arg0: i32) -> (i32, i32) {
    %c0_i32 = arith.constant 0 : i32
    %c0_i32_0 = arith.constant 0 : i32
    return %arg0, %c0_i32 : i32, i32
  }
  func.func @transform_1(%arg0: i32) -> (i32, i32) {
    %c0_i32 = arith.constant 0 : i32
    %c0_i32_0 = arith.constant 0 : i32
    %c0_i32_1 = arith.constant 0 : i32
    return %c0_i32, %c0_i32_0 : i32, i32
  }
  func.func @transform_2(%arg0: i32) -> (i32, i32) {
    %c0_i32 = arith.constant 0 : i32
    %c0_i32_0 = arith.constant 0 : i32
    %c0_i32_1 = arith.constant 0 : i32
    return %c0_i32, %c0_i32_0 : i32, i32
  }
  func.func @transform_3(%arg0: i32) -> (i32, i32) {
    %c0_i32 = arith.constant 0 : i32
    %c0_i32_0 = arith.constant 0 : i32
    %c0_i32_1 = arith.constant 0 : i32
    return %c0_i32, %c0_i32_0 : i32, i32
  }
  func.func @transform_4(%arg0: i32) -> (i32, i32) {
    %c0_i32 = arith.constant 0 : i32
    %c0_i32_0 = arith.constant 0 : i32
    %c0_i32_1 = arith.constant 0 : i32
    return %c0_i32, %c0_i32_0 : i32, i32
  }
  func.func @transform_5(%arg0: i32) -> (i32, i32) {
    %c0_i32 = arith.constant 0 : i32
    %c0_i32_0 = arith.constant 0 : i32
    return %arg0, %c0_i32 : i32, i32
  }
  func.func @transform_6(%arg0: i32) -> (i32, i32) {
    %c0_i32 = arith.constant 0 : i32
    %c0_i32_0 = arith.constant 0 : i32
    return %arg0, %c0_i32 : i32, i32
  }
}

</mosaic_0001>

<llo_original>
// kernel: chebnet_forward.2
$region0: #{chebnet_forward.2}
  #allocation0 [shape = 'u32[]', space=smem, size = 0x4, offset = 0x4, fixed_abs, tag = 'smem constant byte address 0x4 - core index']
  #allocation1 [shape = 'u32[144,128]{1,0:T(1,128)}', space=vmem, size = 0x12000, scoped, tag = 'internal scratch']
  %s0 = inlined_call_operand.vmem [shape: f32[256,16], index: 0, kind: input, shape index: {}]
  %s1 = inlined_call_operand.vmem [shape: f32[16,32], index: 1, kind: input, shape index: {}]
  %s2 = inlined_call_operand.vmem [shape: f32[1,32], index: 2, kind: input, shape index: {}]
  %s3 = inlined_call_operand.vmem [shape: f32[32,64], index: 3, kind: input, shape index: {}]
  %s4 = inlined_call_operand.vmem [shape: f32[1,64], index: 4, kind: input, shape index: {}]
  %s5 = inlined_call_operand.vmem [shape: f32[256,32], index: 5, kind: output, shape index: {0}]
  %s6 = inlined_call_operand.vmem [shape: f32[256,32], index: 6, kind: output, shape index: {1}]
  %7 = xla_tuple %s5, %s6
  %s8 = sld [smem:[#allocation0]]
  $region38: #{chebnet_forward.2} parent=0
    _
  %s10 = ssub.s32 1, %s8
  %s11 = scalar_select 0, %s10, %s8
  // Predicated region
  $region2: #{chebnet_forward.2} parent=0 // pred_check
    _
  $region3: #{chebnet_forward.2} parent=0 // pred_check_branch
    %13 = sbr.rel (0) target = $region5
  $region4: #{chebnet_forward.2} parent=0 // pred_region
    _
  $region5: #{chebnet_forward.2} parent=0 // pred_fallthru
    _
  // Predicated region
  $region6: #{chebnet_forward.2} parent=0 // pred_check
    _
  $region7: #{chebnet_forward.2} parent=0 // pred_check_branch
    %15 = sbr.rel (0) target = $region9
  $region8: #{chebnet_forward.2} parent=0 // pred_region
    _
  $region9: #{chebnet_forward.2} parent=0 // pred_fallthru
    _
  // Predicated region
  $region10: #{chebnet_forward.2} parent=0 // pred_check
    _
  $region11: #{chebnet_forward.2} parent=0 // pred_check_branch
    %17 = sbr.rel (0) target = $region13
  $region12: #{chebnet_forward.2} parent=0 // pred_region
    _
  $region13: #{chebnet_forward.2} parent=0 // pred_fallthru
    _
  // Predicated region
  $region14: #{chebnet_forward.2} parent=0 // pred_check
    _
  $region15: #{chebnet_forward.2} parent=0 // pred_check_branch
    %19 = sbr.rel (0) target = $region17
  $region16: #{chebnet_forward.2} parent=0 // pred_region
    _
  $region17: #{chebnet_forward.2} parent=0 // pred_fallthru
    _
  // Predicated region
  $region18: #{chebnet_forward.2} parent=0 // pred_check
    _
  $region19: #{chebnet_forward.2} parent=0 // pred_check_branch
    %21 = sbr.rel (0) target = $region21
  $region20: #{chebnet_forward.2} parent=0 // pred_region
    _
  $region21: #{chebnet_forward.2} parent=0 // pred_fallthru
    _
  %v22 = vld [vmem:[%s0] sm:$0xff]
  %v23 = vld [vmem:[%s0 + $0x8] sm:$0xff]
  %v24 = vld [vmem:[%s0 + $0x10] sm:$0xff]
  %v25 = vld [vmem:[%s0 + $0x18] sm:$0xff]
  %v26 = vld [vmem:[%s0 + $0x20] sm:$0xff]
  %v27 = vld [vmem:[%s0 + $0x28] sm:$0xff]
  %v28 = vld [vmem:[%s0 + $0x30] sm:$0xff]
  %v29 = vld [vmem:[%s0 + $0x38] sm:$0xff]
  %v30 = vld [vmem:[%s0 + $0x40] sm:$0xff]
  %v31 = vld [vmem:[%s0 + $0x48] sm:$0xff]
  %v32 = vld [vmem:[%s0 + $0x50] sm:$0xff]
  %v33 = vld [vmem:[%s0 + $0x58] sm:$0xff]
  %v34 = vld [vmem:[%s0 + $0x60] sm:$0xff]
  %v35 = vld [vmem:[%s0 + $0x68] sm:$0xff]
  %v36 = vld [vmem:[%s0 + $0x70] sm:$0xff]
  %v37 = vld [vmem:[%s0 + $0x78] sm:$0xff]
  %v38 = vld [vmem:[%s0 + $0x80] sm:$0xff]
  %v39 = vld [vmem:[%s0 + $0x88] sm:$0xff]
  %v40 = vld [vmem:[%s0 + $0x90] sm:$0xff]
  %v41 = vld [vmem:[%s0 + $0x98] sm:$0xff]
  %v42 = vld [vmem:[%s0 + $0xa0] sm:$0xff]
  %v43 = vld [vmem:[%s0 + $0xa8] sm:$0xff]
  %v44 = vld [vmem:[%s0 + $0xb0] sm:$0xff]
  %v45 = vld [vmem:[%s0 + $0xb8] sm:$0xff]
  %v46 = vld [vmem:[%s0 + $0xc0] sm:$0xff]
  %v47 = vld [vmem:[%s0 + $0xc8] sm:$0xff]
  %v48 = vld [vmem:[%s0 + $0xd0] sm:$0xff]
  %v49 = vld [vmem:[%s0 + $0xd8] sm:$0xff]
  %v50 = vld [vmem:[%s0 + $0xe0] sm:$0xff]
  %v51 = vld [vmem:[%s0 + $0xe8] sm:$0xff]
  %v52 = vld [vmem:[%s0 + $0xf0] sm:$0xff]
  %v53 = vld [vmem:[%s0 + $0xf8] sm:$0xff]
  %v54 = vld [vmem:[%s1] sm:$0xff]
  %v55 = vld [vmem:[%s1 + $0x8] sm:$0xff]
  %v56 = vld [vmem:[%s2] sm:$0x1]
  %v58 = vlaneseq
  %v59 = vshrl.u32 %v58, 7
  %v60 = vsub.s32 0, %v59
  %v61 = vrot.slane %v56, %v60
  %vm63 = vcmask 130048
  %v65 = vsel %vm63, %v22, 0
  %v68 = vsel %vm63, %v23, 0
  %v71 = vsel %vm63, %v24, 0
  %v74 = vsel %vm63, %v25, 0
  %v77 = vsel %vm63, %v26, 0
  %v80 = vsel %vm63, %v27, 0
  %v83 = vsel %vm63, %v28, 0
  %v86 = vsel %vm63, %v29, 0
  %v89 = vsel %vm63, %v30, 0
  %v92 = vsel %vm63, %v31, 0
  %v95 = vsel %vm63, %v32, 0
  %v98 = vsel %vm63, %v33, 0
  %v101 = vsel %vm63, %v34, 0
  %v104 = vsel %vm63, %v35, 0
  %v107 = vsel %vm63, %v36, 0
  %v110 = vsel %vm63, %v37, 0
  %v113 = vsel %vm63, %v38, 0
  %v116 = vsel %vm63, %v39, 0
  %v119 = vsel %vm63, %v40, 0
  %v122 = vsel %vm63, %v41, 0
  %v125 = vsel %vm63, %v42, 0
  %v128 = vsel %vm63, %v43, 0
  %v131 = vsel %vm63, %v44, 0
  %v134 = vsel %vm63, %v45, 0
  %v137 = vsel %vm63, %v46, 0
  %v140 = vsel %vm63, %v47, 0
  %v143 = vsel %vm63, %v48, 0
  %v146 = vsel %vm63, %v49, 0
  %v149 = vsel %vm63, %v50, 0
  %v152 = vsel %vm63, %v51, 0
  %v155 = vsel %vm63, %v52, 0
  %v158 = vsel %vm63, %v53, 0
  %160 = vmatprep.subr.mxu0 0.0
  %161 = vmatpush1.msra.mxu0 %v54
  %162 = vmatprep.subr.mxu0 0.0
  %163 = vmatpush1.msra.mxu0 %v55
  %164 = vmatprep.subr.mxu0 0.0
  %165 = vmatpush1.msra.mxu0 0.0
  %166 = vmatprep.subr.mxu0 0.0
  %167 = vmatpush1.msra.mxu0 0.0
  %168 = vmatprep.subr.mxu0 0.0
  %169 = vmatpush1.msra.mxu0 0.0
  %170 = vmatprep.subr.mxu0 0.0
  %171 = vmatpush1.msra.mxu0 0.0
  %172 = vmatprep.subr.mxu0 0.0
  %173 = vmatpush1.msra.mxu0 0.0
  %174 = vmatprep.subr.mxu0 0.0
  %175 = vmatpush1.msra.mxu0 0.0
  %176 = vmatprep.subr.mxu0 0.0
  %177 = vmatpush1.msra.mxu0 0.0
  %178 = vmatprep.subr.mxu0 0.0
  %179 = vmatpush1.msra.mxu0 0.0
  %180 = vmatprep.subr.mxu0 0.0
  %181 = vmatpush1.msra.mxu0 0.0
  %182 = vmatprep.subr.mxu0 0.0
  %183 = vmatpush1.msra.mxu0 0.0
  %184 = vmatprep.subr.mxu0 0.0
  %185 = vmatpush1.msra.mxu0 0.0
  %186 = vmatprep.subr.mxu0 0.0
  %187 = vmatpush1.msra.mxu0 0.0
  %188 = vmatprep.subr.mxu0 0.0
  %189 = vmatpush1.msra.mxu0 0.0
  %190 = vmatprep.subr.mxu0 0.0
  %191 = vmatpush1.msra.mxu0 0.0
  %192 = vmatprep.subr.mxu0 0.0
  %193 = vmatpush1.msra.mxu0 0.0
  %194 = vmatprep.subr.mxu0 0.0
  %195 = vmatpush1.msra.mxu0 0.0
  %196 = vmatprep.subr.mxu0 0.0
  %197 = vmatpush1.msra.mxu0 0.0
  %198 = vmatprep.subr.mxu0 0.0
  %199 = vmatpush1.msra.mxu0 0.0
  %200 = vmatprep.subr.mxu0 0.0
  %201 = vmatpush1.msra.mxu0 0.0
  %202 = vmatprep.subr.mxu0 0.0
  %203 = vmatpush1.msra.mxu0 0.0
  %204 = vmatprep.subr.mxu0 0.0
  %205 = vmatpush1.msra.mxu0 0.0
  %206 = vmatprep.subr.mxu0 0.0
  %207 = vmatpush1.msra.mxu0 0.0
  %208 = vmatprep.subr.mxu0 0.0
  %209 = vmatpush1.msra.mxu0 0.0
  %210 = vmatprep.subr.mxu0 0.0
  %211 = vmatpush1.msra.mxu0 0.0
  %212 = vmatprep.subr.mxu0 0.0
  %213 = vmatpush1.msra.mxu0 0.0
  %214 = vmatprep.subr.mxu0 0.0
  %215 = vmatpush1.msra.mxu0 0.0
  %216 = vmatprep.subr.mxu0 0.0
  %217 = vmatpush1.msra.mxu0 0.0
  %218 = vmatprep.subr.mxu0 0.0
  %219 = vmatpush1.msra.mxu0 0.0
  %220 = vmatprep.subr.mxu0 0.0
  %221 = vmatpush1.msra.mxu0 0.0
  %222 = vmatprep.subr.mxu0 0.0
  %223 = vmatpush1.msra.mxu0 0.0
  %224 = vmatprep.mubr.f32.mxu0 0.0
  %225 = vmatmul.mubr.f32.gmra.mrb[0].mxu0 %v65
  %v226 = vpop.f32.mrb[0].mxu0
  %v227 = vadd.f32 %v61, %v226
  %v228 = vpop.f32.mrb[0].mxu0
  %229 = vmatprep.mubr.f32.mxu0 0.0
  %230 = vmatmul.mubr.f32.gmra.mrb[0].mxu0 %v68
  %v231 = vpop.f32.mrb[0].mxu0
  %v232 = vadd.f32 %v61, %v231
  %v233 = vpop.f32.mrb[0].mxu0
  %234 = vmatprep.mubr.f32.mxu0 0.0
  %235 = vmatmul.mubr.f32.gmra.mrb[0].mxu0 %v71
  %v236 = vpop.f32.mrb[0].mxu0
  %v237 = vadd.f32 %v61, %v236
  %v238 = vpop.f32.mrb[0].mxu0
  %239 = vmatprep.mubr.f32.mxu0 0.0
  %240 = vmatmul.mubr.f32.gmra.mrb[0].mxu0 %v74
  %v241 = vpop.f32.mrb[0].mxu0
  %v242 = vadd.f32 %v61, %v241
  %v243 = vpop.f32.mrb[0].mxu0
  %244 = vmatprep.mubr.f32.mxu0 0.0
  %245 = vmatmul.mubr.f32.gmra.mrb[0].mxu0 %v77
  %v246 = vpop.f32.mrb[0].mxu0
  %v247 = vadd.f32 %v61, %v246
  %v248 = vpop.f32.mrb[0].mxu0
  %249 = vmatprep.mubr.f32.mxu0 0.0
  %250 = vmatmul.mubr.f32.gmra.mrb[0].mxu0 %v80
  %v251 = vpop.f32.mrb[0].mxu0
  %v252 = vadd.f32 %v61, %v251
  %v253 = vpop.f32.mrb[0].mxu0
  %254 = vmatprep.mubr.f32.mxu0 0.0
  %255 = vmatmul.mubr.f32.gmra.mrb[0].mxu0 %v83
  %v256 = vpop.f32.mrb[0].mxu0
  %v257 = vadd.f32 %v61, %v256
  %v258 = vpop.f32.mrb[0].mxu0
  %259 = vmatprep.mubr.f32.mxu0 0.0
  %260 = vmatmul.mubr.f32.gmra.mrb[0].mxu0 %v86
  %v261 = vpop.f32.mrb[0].mxu0
  %v262 = vadd.f32 %v61, %v261
  %v263 = vpop.f32.mrb[0].mxu0
  %264 = vmatprep.mubr.f32.mxu0 0.0
  %265 = vmatmul.mubr.f32.gmra.mrb[0].mxu0 %v89
  %v266 = vpop.f32.mrb[0].mxu0
  %v267 = vadd.f32 %v61, %v266
  %v268 = vpop.f32.mrb[0].mxu0
  %269 = vmatprep.mubr.f32.mxu0 0.0
  %270 = vmatmul.mubr.f32.gmra.mrb[0].mxu0 %v92
  %v271 = vpop.f32.mrb[0].mxu0
  %v272 = vadd.f32 %v61, %v271
  %v273 = vpop.f32.mrb[0].mxu0
  %274 = vmatprep.mubr.f32.mxu0 0.0
  %275 = vmatmul.mubr.f32.gmra.mrb[0].mxu0 %v95
  %v276 = vpop.f32.mrb[0].mxu0
  %v277 = vadd.f32 %v61, %v276
  %v278 = vpop.f32.mrb[0].mxu0
  %279 = vmatprep.mubr.f32.mxu0 0.0
  %280 = vmatmul.mubr.f32.gmra.mrb[0].mxu0 %v98
  %v281 = vpop.f32.mrb[0].mxu0
  %v282 = vadd.f32 %v61, %v281
  %v283 = vpop.f32.mrb[0].mxu0
  %284 = vmatprep.mubr.f32.mxu0 0.0
  %285 = vmatmul.mubr.f32.gmra.mrb[0].mxu0 %v101
  %v286 = vpop.f32.mrb[0].mxu0
  %v287 = vadd.f32 %v61, %v286
  %v288 = vpop.f32.mrb[0].mxu0
  %289 = vmatprep.mubr.f32.mxu0 0.0
  %290 = vmatmul.mubr.f32.gmra.mrb[0].mxu0 %v104
  %v291 = vpop.f32.mrb[0].mxu0
  %v292 = vadd.f32 %v61, %v291
  %v293 = vpop.f32.mrb[0].mxu0
  %294 = vmatprep.mubr.f32.mxu0 0.0
  %295 = vmatmul.mubr.f32.gmra.mrb[0].mxu0 %v107
  %v296 = vpop.f32.mrb[0].mxu0
  %v297 = vadd.f32 %v61, %v296
  %v298 = vpop.f32.mrb[0].mxu0
  %299 = vmatprep.mubr.f32.mxu0 0.0
  %300 = vmatmul.mubr.f32.gmra.mrb[0].mxu0 %v110
  %v301 = vpop.f32.mrb[0].mxu0
  %v302 = vadd.f32 %v61, %v301
  %v303 = vpop.f32.mrb[0].mxu0
  %304 = vmatprep.mubr.f32.mxu0 0.0
  %305 = vmatmul.mubr.f32.gmra.mrb[0].mxu0 %v113
  %v306 = vpop.f32.mrb[0].mxu0
  %v307 = vadd.f32 %v61, %v306
  %v308 = vpop.f32.mrb[0].mxu0
  %309 = vmatprep.mubr.f32.mxu0 0.0
  %310 = vmatmul.mubr.f32.gmra.mrb[0].mxu0 %v116
  %v311 = vpop.f32.mrb[0].mxu0
  %v312 = vadd.f32 %v61, %v311
  %v313 = vpop.f32.mrb[0].mxu0
  %314 = vmatprep.mubr.f32.mxu0 0.0
  %315 = vmatmul.mubr.f32.gmra.mrb[0].mxu0 %v119
  %v316 = vpop.f32.mrb[0].mxu0
  %v317 = vadd.f32 %v61, %v316
  %v318 = vpop.f32.mrb[0].mxu0
  %319 = vmatprep.mubr.f32.mxu0 0.0
  %320 = vmatmul.mubr.f32.gmra.mrb[0].mxu0 %v122
  %v321 = vpop.f32.mrb[0].mxu0
  %v322 = vadd.f32 %v61, %v321
  %v323 = vpop.f32.mrb[0].mxu0
  %324 = vmatprep.mubr.f32.mxu0 0.0
  %325 = vmatmul.mubr.f32.gmra.mrb[0].mxu0 %v125
  %v326 = vpop.f32.mrb[0].mxu0
  %v327 = vadd.f32 %v61, %v326
  %v328 = vpop.f32.mrb[0].mxu0
  %329 = vmatprep.mubr.f32.mxu0 0.0
  %330 = vmatmul.mubr.f32.gmra.mrb[0].mxu0 %v128
  %v331 = vpop.f32.mrb[0].mxu0
  %v332 = vadd.f32 %v61, %v331
  %v333 = vpop.f32.mrb[0].mxu0
  %334 = vmatprep.mubr.f32.mxu0 0.0
  %335 = vmatmul.mubr.f32.gmra.mrb[0].mxu0 %v131
  %v336 = vpop.f32.mrb[0].mxu0
  %v337 = vadd.f32 %v61, %v336
  %v338 = vpop.f32.mrb[0].mxu0
  %339 = vmatprep.mubr.f32.mxu0 0.0
  %340 = vmatmul.mubr.f32.gmra.mrb[0].mxu0 %v134
  %v341 = vpop.f32.mrb[0].mxu0
  %v342 = vadd.f32 %v61, %v341
  %v343 = vpop.f32.mrb[0].mxu0
  %344 = vmatprep.mubr.f32.mxu0 0.0
  %345 = vmatmul.mubr.f32.gmra.mrb[0].mxu0 %v137
  %v346 = vpop.f32.mrb[0].mxu0
  %v347 = vadd.f32 %v61, %v346
  %v348 = vpop.f32.mrb[0].mxu0
  %349 = vmatprep.mubr.f32.mxu0 0.0
  %350 = vmatmul.mubr.f32.gmra.mrb[0].mxu0 %v140
  %v351 = vpop.f32.mrb[0].mxu0
  %v352 = vadd.f32 %v61, %v351
  %v353 = vpop.f32.mrb[0].mxu0
  %354 = vmatprep.mubr.f32.mxu0 0.0
  %355 = vmatmul.mubr.f32.gmra.mrb[0].mxu0 %v143
  %v356 = vpop.f32.mrb[0].mxu0
  %v357 = vadd.f32 %v61, %v356
  %v358 = vpop.f32.mrb[0].mxu0
  %359 = vmatprep.mubr.f32.mxu0 0.0
  %360 = vmatmul.mubr.f32.gmra.mrb[0].mxu0 %v146
  %v361 = vpop.f32.mrb[0].mxu0
  %v362 = vadd.f32 %v61, %v361
  %v363 = vpop.f32.mrb[0].mxu0
  %364 = vmatprep.mubr.f32.mxu0 0.0
  %365 = vmatmul.mubr.f32.gmra.mrb[0].mxu0 %v149
  %v366 = vpop.f32.mrb[0].mxu0
  %v367 = vadd.f32 %v61, %v366
  %v368 = vpop.f32.mrb[0].mxu0
  %369 = vmatprep.mubr.f32.mxu0 0.0
  %370 = vmatmul.mubr.f32.gmra.mrb[0].mxu0 %v152
  %v371 = vpop.f32.mrb[0].mxu0
  %v372 = vadd.f32 %v61, %v371
  %v373 = vpop.f32.mrb[0].mxu0
  %374 = vmatprep.mubr.f32.mxu0 0.0
  %375 = vmatmul.mubr.f32.gmra.mrb[0].mxu0 %v155
  %v376 = vpop.f32.mrb[0].mxu0
  %v377 = vadd.f32 %v61, %v376
  %v378 = vpop.f32.mrb[0].mxu0
  %379 = vmatprep.mubr.f32.mxu0 0.0
  %380 = vmatmul.mubr.f32.gmra.mrb[0].mxu0 %v158
  %v381 = vpop.f32.mrb[0].mxu0
  %v382 = vadd.f32 %v61, %v381
  %v383 = vpop.f32.mrb[0].mxu0
  %384 = vdwg.mxu0
  %v385 = vmax.f32 %v227, 0.0
  %v386 = vmax.f32 %v232, 0.0
  %v387 = vmax.f32 %v237, 0.0
  %v388 = vmax.f32 %v242, 0.0
  %v389 = vmax.f32 %v247, 0.0
  %v390 = vmax.f32 %v252, 0.0
  %v391 = vmax.f32 %v257, 0.0
  %v392 = vmax.f32 %v262, 0.0
  %v393 = vmax.f32 %v267, 0.0
  %v394 = vmax.f32 %v272, 0.0
  %v395 = vmax.f32 %v277, 0.0
  %v396 = vmax.f32 %v282, 0.0
  %v397 = vmax.f32 %v287, 0.0
  %v398 = vmax.f32 %v292, 0.0
  %v399 = vmax.f32 %v297, 0.0
  %v400 = vmax.f32 %v302, 0.0
  %v401 = vmax.f32 %v307, 0.0
  %v402 = vmax.f32 %v312, 0.0
  %v403 = vmax.f32 %v317, 0.0
  %v404 = vmax.f32 %v322, 0.0
  %v405 = vmax.f32 %v327, 0.0
  %v406 = vmax.f32 %v332, 0.0
  %v407 = vmax.f32 %v337, 0.0
  %v408 = vmax.f32 %v342, 0.0
  %v409 = vmax.f32 %v347, 0.0
  %v410 = vmax.f32 %v352, 0.0
  %v411 = vmax.f32 %v357, 0.0
  %v412 = vmax.f32 %v362, 0.0
  %v413 = vmax.f32 %v367, 0.0
  %v414 = vmax.f32 %v372, 0.0
  %v415 = vmax.f32 %v377, 0.0
  %v416 = vmax.f32 %v382, 0.0
  %v417 = vld [vmem:[%s3] sm:$0xff]
  %v418 = vld [vmem:[%s3 + $0x8] sm:$0xff]
  %v419 = vld [vmem:[%s3 + $0x10] sm:$0xff]
  %v420 = vld [vmem:[%s3 + $0x18] sm:$0xff]
  %v421 = vld [vmem:[%s4] sm:$0x1]
  %v423 = vlaneseq
  %v424 = vshrl.u32 %v423, 7
  %v425 = vsub.s32 0, %v424
  %v426 = vrot.slane %v421, %v425
  %vm428 = vcmask 261120
  %v430 = vsel %vm428, %v385, 0
  %v433 = vsel %vm428, %v386, 0
  %v436 = vsel %vm428, %v387, 0
  %v439 = vsel %vm428, %v388, 0
  %v442 = vsel %vm428, %v389, 0
  %v445 = vsel %vm428, %v390, 0
  %v448 = vsel %vm428, %v391, 0
  %v451 = vsel %vm428, %v392, 0
  %v454 = vsel %vm428, %v393, 0
  %v457 = vsel %vm428, %v394, 0
  %v460 = vsel %vm428, %v395, 0
  %v463 = vsel %vm428, %v396, 0
  %v466 = vsel %vm428, %v397, 0
  %v469 = vsel %vm428, %v398, 0
  %v472 = vsel %vm428, %v399, 0
  %v475 = vsel %vm428, %v400, 0
  %v478 = vsel %vm428, %v401, 0
  %v481 = vsel %vm428, %v402, 0
  %v484 = vsel %vm428, %v403, 0
  %v487 = vsel %vm428, %v404, 0
  %v490 = vsel %vm428, %v405, 0
  %v493 = vsel %vm428, %v406, 0
  %v496 = vsel %vm428, %v407, 0
  %v499 = vsel %vm428, %v408, 0
  %v502 = vsel %vm428, %v409, 0
  %v505 = vsel %vm428, %v410, 0
  %v508 = vsel %vm428, %v411, 0
  %v511 = vsel %vm428, %v412, 0
  %v514 = vsel %vm428, %v413, 0
  %v517 = vsel %vm428, %v414, 0
  %v520 = vsel %vm428, %v415, 0
  %v523 = vsel %vm428, %v416, 0
  %525 = vmatprep.subr.mxu0 0.0
  %526 = vmatpush1.msra.mxu0 %v417
  %527 = vmatprep.subr.mxu0 0.0
  %528 = vmatpush1.msra.mxu0 %v418
  %529 = vmatprep.subr.mxu0 0.0
  %530 = vmatpush1.msra.mxu0 %v419
  %531 = vmatprep.subr.mxu0 0.0
  %532 = vmatpush1.msra.mxu0 %v420
  %533 = vmatprep.subr.mxu0 0.0
  %534 = vmatpush1.msra.mxu0 0.0
  %535 = vmatprep.subr.mxu0 0.0
  %536 = vmatpush1.msra.mxu0 0.0
  %537 = vmatprep.subr.mxu0 0.0
  %538 = vmatpush1.msra.mxu0 0.0
  %539 = vmatprep.subr.mxu0 0.0
  %540 = vmatpush1.msra.mxu0 0.0
  %541 = vmatprep.subr.mxu0 0.0
  %542 = vmatpush1.msra.mxu0 0.0
  %543 = vmatprep.subr.mxu0 0.0
  %544 = vmatpush1.msra.mxu0 0.0
  %545 = vmatprep.subr.mxu0 0.0
  %546 = vmatpush1.msra.mxu0 0.0
  %547 = vmatprep.subr.mxu0 0.0
  %548 = vmatpush1.msra.mxu0 0.0
  %549 = vmatprep.subr.mxu0 0.0
  %550 = vmatpush1.msra.mxu0 0.0
  %551 = vmatprep.subr.mxu0 0.0
  %552 = vmatpush1.msra.mxu0 0.0
  %553 = vmatprep.subr.mxu0 0.0
  %554 = vmatpush1.msra.mxu0 0.0
  %555 = vmatprep.subr.mxu0 0.0
  %556 = vmatpush1.msra.mxu0 0.0
  %557 = vmatprep.subr.mxu0 0.0
  %558 = vmatpush1.msra.mxu0 0.0
  %559 = vmatprep.subr.mxu0 0.0
  %560 = vmatpush1.msra.mxu0 0.0
  %561 = vmatprep.subr.mxu0 0.0
  %562 = vmatpush1.msra.mxu0 0.0
  %563 = vmatprep.subr.mxu0 0.0
  %564 = vmatpush1.msra.mxu0 0.0
  %565 = vmatprep.subr.mxu0 0.0
  %566 = vmatpush1.msra.mxu0 0.0
  %567 = vmatprep.subr.mxu0 0.0
  %568 = vmatpush1.msra.mxu0 0.0
  %569 = vmatprep.subr.mxu0 0.0
  %570 = vmatpush1.msra.mxu0 0.0
  %571 = vmatprep.subr.mxu0 0.0
  %572 = vmatpush1.msra.mxu0 0.0
  %573 = vmatprep.subr.mxu0 0.0
  %574 = vmatpush1.msra.mxu0 0.0
  %575 = vmatprep.subr.mxu0 0.0
  %576 = vmatpush1.msra.mxu0 0.0
  %577 = vmatprep.subr.mxu0 0.0
  %578 = vmatpush1.msra.mxu0 0.0
  %579 = vmatprep.subr.mxu0 0.0
  %580 = vmatpush1.msra.mxu0 0.0
  %581 = vmatprep.subr.mxu0 0.0
  %582 = vmatpush1.msra.mxu0 0.0
  %583 = vmatprep.subr.mxu0 0.0
  %584 = vmatpush1.msra.mxu0 0.0
  %585 = vmatprep.subr.mxu0 0.0
  %586 = vmatpush1.msra.mxu0 0.0
  %587 = vmatprep.subr.mxu0 0.0
  %588 = vmatpush1.msra.mxu0 0.0
  %589 = vmatprep.mubr.f32.mxu0 0.0
  %590 = vmatmul.mubr.f32.gmra.mrb[0].mxu0 %v430
  %v591 = vpop.f32.mrb[0].mxu0
  %v592 = vadd.f32 %v426, %v591
  %v593 = vpop.f32.mrb[0].mxu0
  %594 = vmatprep.mubr.f32.mxu0 0.0
  %595 = vmatmul.mubr.f32.gmra.mrb[0].mxu0 %v433
  %v596 = vpop.f32.mrb[0].mxu0
  %v597 = vadd.f32 %v426, %v596
  %v598 = vpop.f32.mrb[0].mxu0
  %599 = vmatprep.mubr.f32.mxu0 0.0
  %600 = vmatmul.mubr.f32.gmra.mrb[0].mxu0 %v436
  %v601 = vpop.f32.mrb[0].mxu0
  %v602 = vadd.f32 %v426, %v601
  %v603 = vpop.f32.mrb[0].mxu0
  %604 = vmatprep.mubr.f32.mxu0 0.0
  %605 = vmatmul.mubr.f32.gmra.mrb[0].mxu0 %v439
  %v606 = vpop.f32.mrb[0].mxu0
  %v607 = vadd.f32 %v426, %v606
  %v608 = vpop.f32.mrb[0].mxu0
  %609 = vmatprep.mubr.f32.mxu0 0.0
  %610 = vmatmul.mubr.f32.gmra.mrb[0].mxu0 %v442
  %v611 = vpop.f32.mrb[0].mxu0
  %v612 = vadd.f32 %v426, %v611
  %v613 = vpop.f32.mrb[0].mxu0
  %614 = vmatprep.mubr.f32.mxu0 0.0
  %615 = vmatmul.mubr.f32.gmra.mrb[0].mxu0 %v445
  %v616 = vpop.f32.mrb[0].mxu0
  %v617 = vadd.f32 %v426, %v616
  %v618 = vpop.f32.mrb[0].mxu0
  %619 = vmatprep.mubr.f32.mxu0 0.0
  %620 = vmatmul.mubr.f32.gmra.mrb[0].mxu0 %v448
  %v621 = vpop.f32.mrb[0].mxu0
  %v622 = vadd.f32 %v426, %v621
  %v623 = vpop.f32.mrb[0].mxu0
  %624 = vmatprep.mubr.f32.mxu0 0.0
  %625 = vmatmul.mubr.f32.gmra.mrb[0].mxu0 %v451
  %v626 = vpop.f32.mrb[0].mxu0
  %v627 = vadd.f32 %v426, %v626
  %v628 = vpop.f32.mrb[0].mxu0
  %629 = vmatprep.mubr.f32.mxu0 0.0
  %630 = vmatmul.mubr.f32.gmra.mrb[0].mxu0 %v454
  %v631 = vpop.f32.mrb[0].mxu0
  %v632 = vadd.f32 %v426, %v631
  %v633 = vpop.f32.mrb[0].mxu0
  %634 = vmatprep.mubr.f32.mxu0 0.0
  %635 = vmatmul.mubr.f32.gmra.mrb[0].mxu0 %v457
  %v636 = vpop.f32.mrb[0].mxu0
  %v637 = vadd.f32 %v426, %v636
  %v638 = vpop.f32.mrb[0].mxu0
  %639 = vmatprep.mubr.f32.mxu0 0.0
  %640 = vmatmul.mubr.f32.gmra.mrb[0].mxu0 %v460
  %v641 = vpop.f32.mrb[0].mxu0
  %v642 = vadd.f32 %v426, %v641
  %v643 = vpop.f32.mrb[0].mxu0
  %644 = vmatprep.mubr.f32.mxu0 0.0
  %645 = vmatmul.mubr.f32.gmra.mrb[0].mxu0 %v463
  %v646 = vpop.f32.mrb[0].mxu0
  %v647 = vadd.f32 %v426, %v646
  %v648 = vpop.f32.mrb[0].mxu0
  %649 = vmatprep.mubr.f32.mxu0 0.0
  %650 = vmatmul.mubr.f32.gmra.mrb[0].mxu0 %v466
  %v651 = vpop.f32.mrb[0].mxu0
  %v652 = vadd.f32 %v426, %v651
  %v653 = vpop.f32.mrb[0].mxu0
  %654 = vmatprep.mubr.f32.mxu0 0.0
  %655 = vmatmul.mubr.f32.gmra.mrb[0].mxu0 %v469
  %v656 = vpop.f32.mrb[0].mxu0
  %v657 = vadd.f32 %v426, %v656
  %v658 = vpop.f32.mrb[0].mxu0
  %659 = vmatprep.mubr.f32.mxu0 0.0
  %660 = vmatmul.mubr.f32.gmra.mrb[0].mxu0 %v472
  %v661 = vpop.f32.mrb[0].mxu0
  %v662 = vadd.f32 %v426, %v661
  %v663 = vpop.f32.mrb[0].mxu0
  %664 = vmatprep.mubr.f32.mxu0 0.0
  %665 = vmatmul.mubr.f32.gmra.mrb[0].mxu0 %v475
  %v666 = vpop.f32.mrb[0].mxu0
  %v667 = vadd.f32 %v426, %v666
  %v668 = vpop.f32.mrb[0].mxu0
  %669 = vmatprep.mubr.f32.mxu0 0.0
  %670 = vmatmul.mubr.f32.gmra.mrb[0].mxu0 %v478
  %v671 = vpop.f32.mrb[0].mxu0
  %v672 = vadd.f32 %v426, %v671
  %v673 = vpop.f32.mrb[0].mxu0
  %674 = vmatprep.mubr.f32.mxu0 0.0
  %675 = vmatmul.mubr.f32.gmra.mrb[0].mxu0 %v481
  %v676 = vpop.f32.mrb[0].mxu0
  %v677 = vadd.f32 %v426, %v676
  %v678 = vpop.f32.mrb[0].mxu0
  %679 = vmatprep.mubr.f32.mxu0 0.0
  %680 = vmatmul.mubr.f32.gmra.mrb[0].mxu0 %v484
  %v681 = vpop.f32.mrb[0].mxu0
  %v682 = vadd.f32 %v426, %v681
  %v683 = vpop.f32.mrb[0].mxu0
  %684 = vmatprep.mubr.f32.mxu0 0.0
  %685 = vmatmul.mubr.f32.gmra.mrb[0].mxu0 %v487
  %v686 = vpop.f32.mrb[0].mxu0
  %v687 = vadd.f32 %v426, %v686
  %v688 = vpop.f32.mrb[0].mxu0
  %689 = vmatprep.mubr.f32.mxu0 0.0
  %690 = vmatmul.mubr.f32.gmra.mrb[0].mxu0 %v490
  %v691 = vpop.f32.mrb[0].mxu0
  %v692 = vadd.f32 %v426, %v691
  %v693 = vpop.f32.mrb[0].mxu0
  %694 = vmatprep.mubr.f32.mxu0 0.0
  %695 = vmatmul.mubr.f32.gmra.mrb[0].mxu0 %v493
  %v696 = vpop.f32.mrb[0].mxu0
  %v697 = vadd.f32 %v426, %v696
  %v698 = vpop.f32.mrb[0].mxu0
  %699 = vmatprep.mubr.f32.mxu0 0.0
  %700 = vmatmul.mubr.f32.gmra.mrb[0].mxu0 %v496
  %v701 = vpop.f32.mrb[0].mxu0
  %v702 = vadd.f32 %v426, %v701
  %v703 = vpop.f32.mrb[0].mxu0
  %704 = vmatprep.mubr.f32.mxu0 0.0
  %705 = vmatmul.mubr.f32.gmra.mrb[0].mxu0 %v499
  %v706 = vpop.f32.mrb[0].mxu0
  %v707 = vadd.f32 %v426, %v706
  %v708 = vpop.f32.mrb[0].mxu0
  %709 = vmatprep.mubr.f32.mxu0 0.0
  %710 = vmatmul.mubr.f32.gmra.mrb[0].mxu0 %v502
  %v711 = vpop.f32.mrb[0].mxu0
  %v712 = vadd.f32 %v426, %v711
  %v713 = vpop.f32.mrb[0].mxu0
  %714 = vmatprep.mubr.f32.mxu0 0.0
  %715 = vmatmul.mubr.f32.gmra.mrb[0].mxu0 %v505
  %v716 = vpop.f32.mrb[0].mxu0
  %v717 = vadd.f32 %v426, %v716
  %v718 = vpop.f32.mrb[0].mxu0
  %719 = vmatprep.mubr.f32.mxu0 0.0
  %720 = vmatmul.mubr.f32.gmra.mrb[0].mxu0 %v508
  %v721 = vpop.f32.mrb[0].mxu0
  %v722 = vadd.f32 %v426, %v721
  %v723 = vpop.f32.mrb[0].mxu0
  %724 = vmatprep.mubr.f32.mxu0 0.0
  %725 = vmatmul.mubr.f32.gmra.mrb[0].mxu0 %v511
  %v726 = vpop.f32.mrb[0].mxu0
  %v727 = vadd.f32 %v426, %v726
  %v728 = vpop.f32.mrb[0].mxu0
  %729 = vmatprep.mubr.f32.mxu0 0.0
  %730 = vmatmul.mubr.f32.gmra.mrb[0].mxu0 %v514
  %v731 = vpop.f32.mrb[0].mxu0
  %v732 = vadd.f32 %v426, %v731
  %v733 = vpop.f32.mrb[0].mxu0
  %734 = vmatprep.mubr.f32.mxu0 0.0
  %735 = vmatmul.mubr.f32.gmra.mrb[0].mxu0 %v517
  %v736 = vpop.f32.mrb[0].mxu0
  %v737 = vadd.f32 %v426, %v736
  %v738 = vpop.f32.mrb[0].mxu0
  %739 = vmatprep.mubr.f32.mxu0 0.0
  %740 = vmatmul.mubr.f32.gmra.mrb[0].mxu0 %v520
  %v741 = vpop.f32.mrb[0].mxu0
  %v742 = vadd.f32 %v426, %v741
  %v743 = vpop.f32.mrb[0].mxu0
  %744 = vmatprep.mubr.f32.mxu0 0.0
  %745 = vmatmul.mubr.f32.gmra.mrb[0].mxu0 %v523
  %v746 = vpop.f32.mrb[0].mxu0
  %v747 = vadd.f32 %v426, %v746
  %v748 = vpop.f32.mrb[0].mxu0
  %749 = vdwg.mxu0
  %750 = vst.msk [vmem:[%s5] sm:$0xff] %vm428, %v592
  %751 = vst.msk [vmem:[%s5 + $0x8] sm:$0xff] %vm428, %v597
  %752 = vst.msk [vmem:[%s5 + $0x10] sm:$0xff] %vm428, %v602
  %753 = vst.msk [vmem:[%s5 + $0x18] sm:$0xff] %vm428, %v607
  %754 = vst.msk [vmem:[%s5 + $0x20] sm:$0xff] %vm428, %v612
  %755 = vst.msk [vmem:[%s5 + $0x28] sm:$0xff] %vm428, %v617
  %756 = vst.msk [vmem:[%s5 + $0x30] sm:$0xff] %vm428, %v622
  %757 = vst.msk [vmem:[%s5 + $0x38] sm:$0xff] %vm428, %v627
  %758 = vst.msk [vmem:[%s5 + $0x40] sm:$0xff] %vm428, %v632
  %759 = vst.msk [vmem:[%s5 + $0x48] sm:$0xff] %vm428, %v637
  %760 = vst.msk [vmem:[%s5 + $0x50] sm:$0xff] %vm428, %v642
  %761 = vst.msk [vmem:[%s5 + $0x58] sm:$0xff] %vm428, %v647
  %762 = vst.msk [vmem:[%s5 + $0x60] sm:$0xff] %vm428, %v652
  %763 = vst.msk [vmem:[%s5 + $0x68] sm:$0xff] %vm428, %v657
  %764 = vst.msk [vmem:[%s5 + $0x70] sm:$0xff] %vm428, %v662
  %765 = vst.msk [vmem:[%s5 + $0x78] sm:$0xff] %vm428, %v667
  %766 = vst.msk [vmem:[%s5 + $0x80] sm:$0xff] %vm428, %v672
  %767 = vst.msk [vmem:[%s5 + $0x88] sm:$0xff] %vm428, %v677
  %768 = vst.msk [vmem:[%s5 + $0x90] sm:$0xff] %vm428, %v682
  %769 = vst.msk [vmem:[%s5 + $0x98] sm:$0xff] %vm428, %v687
  %770 = vst.msk [vmem:[%s5 + $0xa0] sm:$0xff] %vm428, %v692
  %771 = vst.msk [vmem:[%s5 + $0xa8] sm:$0xff] %vm428, %v697
  %772 = vst.msk [vmem:[%s5 + $0xb0] sm:$0xff] %vm428, %v702
  %773 = vst.msk [vmem:[%s5 + $0xb8] sm:$0xff] %vm428, %v707
  %774 = vst.msk [vmem:[%s5 + $0xc0] sm:$0xff] %vm428, %v712
  %775 = vst.msk [vmem:[%s5 + $0xc8] sm:$0xff] %vm428, %v717
  %776 = vst.msk [vmem:[%s5 + $0xd0] sm:$0xff] %vm428, %v722
  %777 = vst.msk [vmem:[%s5 + $0xd8] sm:$0xff] %vm428, %v727
  %778 = vst.msk [vmem:[%s5 + $0xe0] sm:$0xff] %vm428, %v732
  %779 = vst.msk [vmem:[%s5 + $0xe8] sm:$0xff] %vm428, %v737
  %780 = vst.msk [vmem:[%s5 + $0xf0] sm:$0xff] %vm428, %v742
  %781 = vst.msk [vmem:[%s5 + $0xf8] sm:$0xff] %vm428, %v747
  %814 = vrot.lane.b32.xlu0 %v592, 96
  %v815 = vpop.permute.xlu0 %814
  %816 = vrot.lane.b32.xlu0 %v597, 96
  %v817 = vpop.permute.xlu0 %816
  %818 = vrot.lane.b32.xlu0 %v602, 96
  %v819 = vpop.permute.xlu0 %818
  %820 = vrot.lane.b32.xlu0 %v607, 96
  %v821 = vpop.permute.xlu0 %820
  %822 = vrot.lane.b32.xlu0 %v612, 96
  %v823 = vpop.permute.xlu0 %822
  %824 = vrot.lane.b32.xlu0 %v617, 96
  %v825 = vpop.permute.xlu0 %824
  %826 = vrot.lane.b32.xlu0 %v622, 96
  %v827 = vpop.permute.xlu0 %826
  %828 = vrot.lane.b32.xlu0 %v627, 96
  %v829 = vpop.permute.xlu0 %828
  %830 = vrot.lane.b32.xlu0 %v632, 96
  %v831 = vpop.permute.xlu0 %830
  %832 = vrot.lane.b32.xlu0 %v637, 96
  %v833 = vpop.permute.xlu0 %832
  %834 = vrot.lane.b32.xlu0 %v642, 96
  %v835 = vpop.permute.xlu0 %834
  %836 = vrot.lane.b32.xlu0 %v647, 96
  %v837 = vpop.permute.xlu0 %836
  %838 = vrot.lane.b32.xlu0 %v652, 96
  %v839 = vpop.permute.xlu0 %838
  %840 = vrot.lane.b32.xlu0 %v657, 96
  %v841 = vpop.permute.xlu0 %840
  %842 = vrot.lane.b32.xlu0 %v662, 96
  %v843 = vpop.permute.xlu0 %842
  %844 = vrot.lane.b32.xlu0 %v667, 96
  %v845 = vpop.permute.xlu0 %844
  %846 = vrot.lane.b32.xlu0 %v672, 96
  %v847 = vpop.permute.xlu0 %846
  %848 = vrot.lane.b32.xlu0 %v677, 96
  %v849 = vpop.permute.xlu0 %848
  %850 = vrot.lane.b32.xlu0 %v682, 96
  %v851 = vpop.permute.xlu0 %850
  %852 = vrot.lane.b32.xlu0 %v687, 96
  %v853 = vpop.permute.xlu0 %852
  %854 = vrot.lane.b32.xlu0 %v692, 96
  %v855 = vpop.permute.xlu0 %854
  %856 = vrot.lane.b32.xlu0 %v697, 96
  %v857 = vpop.permute.xlu0 %856
  %858 = vrot.lane.b32.xlu0 %v702, 96
  %v859 = vpop.permute.xlu0 %858
  %860 = vrot.lane.b32.xlu0 %v707, 96
  %v861 = vpop.permute.xlu0 %860
  %862 = vrot.lane.b32.xlu0 %v712, 96
  %v863 = vpop.permute.xlu0 %862
  %864 = vrot.lane.b32.xlu0 %v717, 96
  %v865 = vpop.permute.xlu0 %864
  %866 = vrot.lane.b32.xlu0 %v722, 96
  %v867 = vpop.permute.xlu0 %866
  %868 = vrot.lane.b32.xlu0 %v727, 96
  %v869 = vpop.permute.xlu0 %868
  %870 = vrot.lane.b32.xlu0 %v732, 96
  %v871 = vpop.permute.xlu0 %870
  %872 = vrot.lane.b32.xlu0 %v737, 96
  %v873 = vpop.permute.xlu0 %872
  %874 = vrot.lane.b32.xlu0 %v742, 96
  %v875 = vpop.permute.xlu0 %874
  %876 = vrot.lane.b32.xlu0 %v747, 96
  %v877 = vpop.permute.xlu0 %876
  %910 = vst.msk [vmem:[%s6] sm:$0xff] %vm428, %v815
  %911 = vst.msk [vmem:[%s6 + $0x8] sm:$0xff] %vm428, %v817
  %912 = vst.msk [vmem:[%s6 + $0x10] sm:$0xff] %vm428, %v819
  %913 = vst.msk [vmem:[%s6 + $0x18] sm:$0xff] %vm428, %v821
  %914 = vst.msk [vmem:[%s6 + $0x20] sm:$0xff] %vm428, %v823
  %915 = vst.msk [vmem:[%s6 + $0x28] sm:$0xff] %vm428, %v825
  %916 = vst.msk [vmem:[%s6 + $0x30] sm:$0xff] %vm428, %v827
  %917 = vst.msk [vmem:[%s6 + $0x38] sm:$0xff] %vm428, %v829
  %918 = vst.msk [vmem:[%s6 + $0x40] sm:$0xff] %vm428, %v831
  %919 = vst.msk [vmem:[%s6 + $0x48] sm:$0xff] %vm428, %v833
  %920 = vst.msk [vmem:[%s6 + $0x50] sm:$0xff] %vm428, %v835
  %921 = vst.msk [vmem:[%s6 + $0x58] sm:$0xff] %vm428, %v837
  %922 = vst.msk [vmem:[%s6 + $0x60] sm:$0xff] %vm428, %v839
  %923 = vst.msk [vmem:[%s6 + $0x68] sm:$0xff] %vm428, %v841
  %924 = vst.msk [vmem:[%s6 + $0x70] sm:$0xff] %vm428, %v843
  %925 = vst.msk [vmem:[%s6 + $0x78] sm:$0xff] %vm428, %v845
  %926 = vst.msk [vmem:[%s6 + $0x80] sm:$0xff] %vm428, %v847
  %927 = vst.msk [vmem:[%s6 + $0x88] sm:$0xff] %vm428, %v849
  %928 = vst.msk [vmem:[%s6 + $0x90] sm:$0xff] %vm428, %v851
  %929 = vst.msk [vmem:[%s6 + $0x98] sm:$0xff] %vm428, %v853
  %930 = vst.msk [vmem:[%s6 + $0xa0] sm:$0xff] %vm428, %v855
  %931 = vst.msk [vmem:[%s6 + $0xa8] sm:$0xff] %vm428, %v857
  %932 = vst.msk [vmem:[%s6 + $0xb0] sm:$0xff] %vm428, %v859
  %933 = vst.msk [vmem:[%s6 + $0xb8] sm:$0xff] %vm428, %v861
  %934 = vst.msk [vmem:[%s6 + $0xc0] sm:$0xff] %vm428, %v863
  %935 = vst.msk [vmem:[%s6 + $0xc8] sm:$0xff] %vm428, %v865
  %936 = vst.msk [vmem:[%s6 + $0xd0] sm:$0xff] %vm428, %v867
  %937 = vst.msk [vmem:[%s6 + $0xd8] sm:$0xff] %vm428, %v869
  %938 = vst.msk [vmem:[%s6 + $0xe0] sm:$0xff] %vm428, %v871
  %939 = vst.msk [vmem:[%s6 + $0xe8] sm:$0xff] %vm428, %v873
  %940 = vst.msk [vmem:[%s6 + $0xf0] sm:$0xff] %vm428, %v875
  %941 = vst.msk [vmem:[%s6 + $0xf8] sm:$0xff] %vm428, %v877
  // Predicated region
  $region22: #{chebnet_forward.2} parent=0 // pred_check
    _
  $region23: #{chebnet_forward.2} parent=0 // pred_check_branch
    %943 = sbr.rel (0) target = $region25
  $region24: #{chebnet_forward.2} parent=0 // pred_region
    _
  $region25: #{chebnet_forward.2} parent=0 // pred_fallthru
    _
  // Predicated region
  $region26: #{chebnet_forward.2} parent=0 // pred_check
    _
  $region27: #{chebnet_forward.2} parent=0 // pred_check_branch
    %945 = sbr.rel (0) target = $region29
  $region28: #{chebnet_forward.2} parent=0 // pred_region
    _
  $region29: #{chebnet_forward.2} parent=0 // pred_fallthru
    _
  // Predicated region
  $region30: #{chebnet_forward.2} parent=0 // pred_check
    _
  $region31: #{chebnet_forward.2} parent=0 // pred_check_branch
    %947 = sbr.rel (0) target = $region33
  $region32: #{chebnet_forward.2} parent=0 // pred_region
    _
  $region33: #{chebnet_forward.2} parent=0 // pred_fallthru
    _
  // Predicated region
  $region34: #{chebnet_forward.2} parent=0 // pred_check
    _
  $region35: #{chebnet_forward.2} parent=0 // pred_check_branch
    %949 = sbr.rel (0) target = $region37
  $region36: #{chebnet_forward.2} parent=0 // pred_region
    _
  $region37: #{chebnet_forward.2} parent=0 // pred_fallthru
    _

// kernel: chebnet_forward.3
$region0: #{chebnet_forward.3}
  #allocation0 [shape = 'u32[]', space=smem, size = 0x4, offset = 0x4, fixed_abs, tag = 'smem constant byte address 0x4 - core index']
  #allocation1 [shape = 'u32[144,128]{1,0:T(1,128)}', space=vmem, size = 0x12000, scoped, tag = 'internal scratch']
  #allocation2 [shape = 'f32[256,32]{1,0:T(8,128)}', space=vmem, size = 0x20000, scoped, tag = 'scratch operand']
  #allocation3 [shape = 's32[1]{0}', space=sflag, size = 0x4, scoped, tag = 'scoped memory for chebnet_forward.3']
  #allocation4 [shape = 's32[1]{0:T(128)S(6)}', space=smem, size = 0x200, scoped, tag = 'prefetched SMEM operand 0']
  #allocation5 [shape = 's32[1,1]{1,0:T(1,128)S(6)}', space=smem, size = 0x200, scoped, tag = 'prefetched SMEM operand 1']
  %s0 = inlined_call_operand.<no memory space> [shape: s32[1], index: 0, kind: input, shape index: {}]
  %s1 = inlined_call_operand.<no memory space> [shape: s32[1,1], index: 1, kind: input, shape index: {}]
  %s2 = inlined_call_operand.vmem [shape: bf16[256,256], index: 2, kind: input, shape index: {}]
  %s3 = inlined_call_operand.vmem [shape: f32[256,32], index: 3, kind: input, shape index: {}]
  %s4 = inlined_call_operand.vmem [shape: f32[256,32], index: 4, kind: input, shape index: {}]
  %s5 = inlined_call_operand.vmem [shape: f32[32,2], index: 5, kind: input, shape index: {}]
  %s6 = inlined_call_operand.vmem [shape: f32[1,2], index: 6, kind: input, shape index: {}]
  %s7 = inlined_call_operand.vmem [shape: f32[256,2], index: 7, kind: output, shape index: {}]
  %s8 = sld [smem:[#allocation0]]
  $region42: #{chebnet_forward.3} parent=0
    _
  %s10 = ssub.s32 1, %s8
  %s11 = scalar_select 0, %s10, %s8
  %12 = sst [smem:[#allocation4]] %s0
  %13 = sst [smem:[#allocation5]] %s1
  // Predicated region
  $region2: #{chebnet_forward.3} parent=0 // pred_check
    _
  $region3: #{chebnet_forward.3} parent=0 // pred_check_branch
    %15 = sbr.rel (0) target = $region5
  $region4: #{chebnet_forward.3} parent=0 // pred_region
    %s16 = sadd.s32 0, 0
    %s17 = smul.u32 %s16, 128
    %s18 = sadd.s32 %s17, 0
    %s19 = sld [smem:[#allocation5 + %s18]]
    %s20 = smul.u32 2, %s19
    %p21 = scmp.lt.s32.totalorder %s20, 1
    %s22 = scalar_select %p21, %s20, 1
    %s23 = smul.addr %s22, 4
    %s24 = scalar_lea.vmem %s2, %s23
    %s25 = sadd.s32 0, 0
    %s26 = smul.u32 %s25, 128
    %s27 = sadd.s32 %s26, 0
    %s28 = sld [smem:[#allocation5 + %s27]]
    %s29 = smul.u32 2, %s28
  $region5: #{chebnet_forward.3} parent=0 // pred_fallthru
    _
  // Predicated region
  $region6: #{chebnet_forward.3} parent=0 // pred_check
    _
  $region7: #{chebnet_forward.3} parent=0 // pred_check_branch
    %31 = sbr.rel (0) target = $region9
  $region8: #{chebnet_forward.3} parent=0 // pred_region
    _
  $region9: #{chebnet_forward.3} parent=0 // pred_fallthru
    _
  // Predicated region
  $region10: #{chebnet_forward.3} parent=0 // pred_check
    _
  $region11: #{chebnet_forward.3} parent=0 // pred_check_branch
    %33 = sbr.rel (0) target = $region13
  $region12: #{chebnet_forward.3} parent=0 // pred_region
    _
  $region13: #{chebnet_forward.3} parent=0 // pred_fallthru
    _
  // Predicated region
  $region14: #{chebnet_forward.3} parent=0 // pred_check
    _
  $region15: #{chebnet_forward.3} parent=0 // pred_check_branch
    %35 = sbr.rel (0) target = $region17
  $region16: #{chebnet_forward.3} parent=0 // pred_region
    _
  $region17: #{chebnet_forward.3} parent=0 // pred_fallthru
    _
  // Predicated region
  $region18: #{chebnet_forward.3} parent=0 // pred_check
    _
  $region19: #{chebnet_forward.3} parent=0 // pred_check_branch
    %37 = sbr.rel (0) target = $region21
  $region20: #{chebnet_forward.3} parent=0 // pred_region
    _
  $region21: #{chebnet_forward.3} parent=0 // pred_fallthru
    _
  %s38 = sadd.s32 0, 0
  %s39 = smul.u32 %s38, 128
  %s40 = sadd.s32 %s39, 0
  %s41 = sld [smem:[#allocation5 + %s40]]
  %s42 = smul.u32 2, %s41
  %p43 = scmp.lt.s32.totalorder %s42, 1
  %s44 = scalar_select %p43, %s42, 1
  %s45 = smul.addr %s44, 4
  %s46 = scalar_lea.vmem %s2, %s45
  %s47 = sadd.s32 0, 0
  %s48 = smul.u32 %s47, 128
  %s49 = sadd.s32 %s48, 0
  %s50 = sld [smem:[#allocation5 + %s49]]
  %s51 = smul.u32 2, %s50
  %p52 = scmp.lt.s32.totalorder %s51, 1
  %s53 = scalar_select %p52, %s51, 1
  %s54 = smul.addr %s53, 4
  %s55 = scalar_lea.vmem %s2, %s54
  %s56 = sadd.s32 0, 0
  %s57 = smul.u32 %s56, 128
  %s58 = sadd.s32 %s57, 0
  %s59 = sld [smem:[#allocation5 + %s58]]
  %s60 = smul.u32 2, %s59
  %p61 = scmp.eq.s32.totalorder 0, 0
  // Predicated region
  $region22: #{chebnet_forward.3} parent=0 // pred_check
    %p62 = pneg %p61
  $region23: #{chebnet_forward.3} parent=0 // pred_check_branch
    %64 = sbr.rel (%p62) target = $region25
  $region24: #{chebnet_forward.3} parent=0 // pred_region
    %vm65 = vcmask 261120
    %66 = vst.msk [vmem:[#allocation2] sm:$0xff] %vm65, 0.0
    %67 = vst.msk [vmem:[#allocation2 + $0x8] sm:$0xff] %vm65, 0.0
    %68 = vst.msk [vmem:[#allocation2 + $0x10] sm:$0xff] %vm65, 0.0
    %69 = vst.msk [vmem:[#allocation2 + $0x18] sm:$0xff] %vm65, 0.0
    %70 = vst.msk [vmem:[#allocation2 + $0x20] sm:$0xff] %vm65, 0.0
    %71 = vst.msk [vmem:[#allocation2 + $0x28] sm:$0xff] %vm65, 0.0
    %72 = vst.msk [vmem:[#allocation2 + $0x30] sm:$0xff] %vm65, 0.0
    %73 = vst.msk [vmem:[#allocation2 + $0x38] sm:$0xff] %vm65, 0.0
    %74 = vst.msk [vmem:[#allocation2 + $0x40] sm:$0xff] %vm65, 0.0
    %75 = vst.msk [vmem:[#allocation2 + $0x48] sm:$0xff] %vm65, 0.0
    %76 = vst.msk [vmem:[#allocation2 + $0x50] sm:$0xff] %vm65, 0.0
    %77 = vst.msk [vmem:[#allocation2 + $0x58] sm:$0xff] %vm65, 0.0
    %78 = vst.msk [vmem:[#allocation2 + $0x60] sm:$0xff] %vm65, 0.0
    %79 = vst.msk [vmem:[#allocation2 + $0x68] sm:$0xff] %vm65, 0.0
    %80 = vst.msk [vmem:[#allocation2 + $0x70] sm:$0xff] %vm65, 0.0
    %81 = vst.msk [vmem:[#allocation2 + $0x78] sm:$0xff] %vm65, 0.0
    %82 = vst.msk [vmem:[#allocation2 + $0x80] sm:$0xff] %vm65, 0.0
    %83 = vst.msk [vmem:[#allocation2 + $0x88] sm:$0xff] %vm65, 0.0
    %84 = vst.msk [vmem:[#allocation2 + $0x90] sm:$0xff] %vm65, 0.0
    %85 = vst.msk [vmem:[#allocation2 + $0x98] sm:$0xff] %vm65, 0.0
    %86 = vst.msk [vmem:[#allocation2 + $0xa0] sm:$0xff] %vm65, 0.0
    %87 = vst.msk [vmem:[#allocation2 + $0xa8] sm:$0xff] %vm65, 0.0
    %88 = vst.msk [vmem:[#allocation2 + $0xb0] sm:$0xff] %vm65, 0.0
    %89 = vst.msk [vmem:[#allocation2 + $0xb8] sm:$0xff] %vm65, 0.0
    %90 = vst.msk [vmem:[#allocation2 + $0xc0] sm:$0xff] %vm65, 0.0
    %91 = vst.msk [vmem:[#allocation2 + $0xc8] sm:$0xff] %vm65, 0.0
    %92 = vst.msk [vmem:[#allocation2 + $0xd0] sm:$0xff] %vm65, 0.0
    %93 = vst.msk [vmem:[#allocation2 + $0xd8] sm:$0xff] %vm65, 0.0
    %94 = vst.msk [vmem:[#allocation2 + $0xe0] sm:$0xff] %vm65, 0.0
    %95 = vst.msk [vmem:[#allocation2 + $0xe8] sm:$0xff] %vm65, 0.0
    %96 = vst.msk [vmem:[#allocation2 + $0xf0] sm:$0xff] %vm65, 0.0
    %97 = vst.msk [vmem:[#allocation2 + $0xf8] sm:$0xff] %vm65, 0.0
  $region25: #{chebnet_forward.3} parent=0 // pred_fallthru
    _
  %s98 = sld [smem:[#allocation4]]
  %p99 = scmp.lt.s32.totalorder 0, %s98
  // Predicated region
  $region26: #{chebnet_forward.3} parent=0 // pred_check
    %p100 = pneg %p99
  $region27: #{chebnet_forward.3} parent=0 // pred_check_branch
    %102 = sbr.rel (%p100) target = $region29
  $region28: #{chebnet_forward.3} parent=0 // pred_region
    %s103 = sadd.s32 0, 0
    %s104 = smul.u32 %s103, 128
    %s105 = sadd.s32 %s104, 0
    %s106 = sld [smem:[#allocation5 + %s105]]
    %s107 = smul.u32 %s106, 256
    %s108 = scalar_lea.vmem %s3, %s107
    %v109 = vld [vmem:[%s108] sm:$0xff]
    %v110 = vld [vmem:[%s108 + $0x8] sm:$0xff]
    %v111 = vld [vmem:[%s108 + $0x10] sm:$0xff]
    %v112 = vld [vmem:[%s108 + $0x18] sm:$0xff]
    %v113 = vld [vmem:[%s108 + $0x20] sm:$0xff]
    %v114 = vld [vmem:[%s108 + $0x28] sm:$0xff]
    %v115 = vld [vmem:[%s108 + $0x30] sm:$0xff]
    %v116 = vld [vmem:[%s108 + $0x38] sm:$0xff]
    %v117 = vld [vmem:[%s108 + $0x40] sm:$0xff]
    %v118 = vld [vmem:[%s108 + $0x48] sm:$0xff]
    %v119 = vld [vmem:[%s108 + $0x50] sm:$0xff]
    %v120 = vld [vmem:[%s108 + $0x58] sm:$0xff]
    %v121 = vld [vmem:[%s108 + $0x60] sm:$0xff]
    %v122 = vld [vmem:[%s108 + $0x68] sm:$0xff]
    %v123 = vld [vmem:[%s108 + $0x70] sm:$0xff]
    %v124 = vld [vmem:[%s108 + $0x78] sm:$0xff]
    %v125 = vld [vmem:[%s108 + $0x80] sm:$0xff]
    %v126 = vld [vmem:[%s108 + $0x88] sm:$0xff]
    %v127 = vld [vmem:[%s108 + $0x90] sm:$0xff]
    %v128 = vld [vmem:[%s108 + $0x98] sm:$0xff]
    %v129 = vld [vmem:[%s108 + $0xa0] sm:$0xff]
    %v130 = vld [vmem:[%s108 + $0xa8] sm:$0xff]
    %v131 = vld [vmem:[%s108 + $0xb0] sm:$0xff]
    %v132 = vld [vmem:[%s108 + $0xb8] sm:$0xff]
    %v133 = vld [vmem:[%s108 + $0xc0] sm:$0xff]
    %v134 = vld [vmem:[%s108 + $0xc8] sm:$0xff]
    %v135 = vld [vmem:[%s108 + $0xd0] sm:$0xff]
    %v136 = vld [vmem:[%s108 + $0xd8] sm:$0xff]
    %v137 = vld [vmem:[%s108 + $0xe0] sm:$0xff]
    %v138 = vld [vmem:[%s108 + $0xe8] sm:$0xff]
    %v139 = vld [vmem:[%s108 + $0xf0] sm:$0xff]
    %v140 = vld [vmem:[%s108 + $0xf8] sm:$0xff]
    %v141 = vld [vmem:[#allocation2] sm:$0xff]
    %v142 = vld [vmem:[#allocation2 + $0x8] sm:$0xff]
    %v143 = vld [vmem:[#allocation2 + $0x10] sm:$0xff]
    %v144 = vld [vmem:[#allocation2 + $0x18] sm:$0xff]
    %v145 = vld [vmem:[#allocation2 + $0x20] sm:$0xff]
    %v146 = vld [vmem:[#allocation2 + $0x28] sm:$0xff]
    %v147 = vld [vmem:[#allocation2 + $0x30] sm:$0xff]
    %v148 = vld [vmem:[#allocation2 + $0x38] sm:$0xff]
    %v149 = vld [vmem:[#allocation2 + $0x40] sm:$0xff]
    %v150 = vld [vmem:[#allocation2 + $0x48] sm:$0xff]
    %v151 = vld [vmem:[#allocation2 + $0x50] sm:$0xff]
    %v152 = vld [vmem:[#allocation2 + $0x58] sm:$0xff]
    %v153 = vld [vmem:[#allocation2 + $0x60] sm:$0xff]
    %v154 = vld [vmem:[#allocation2 + $0x68] sm:$0xff]
    %v155 = vld [vmem:[#allocation2 + $0x70] sm:$0xff]
    %v156 = vld [vmem:[#allocation2 + $0x78] sm:$0xff]
    %v157 = vld [vmem:[#allocation2 + $0x80] sm:$0xff]
    %v158 = vld [vmem:[#allocation2 + $0x88] sm:$0xff]
    %v159 = vld [vmem:[#allocation2 + $0x90] sm:$0xff]
    %v160 = vld [vmem:[#allocation2 + $0x98] sm:$0xff]
    %v161 = vld [vmem:[#allocation2 + $0xa0] sm:$0xff]
    %v162 = vld [vmem:[#allocation2 + $0xa8] sm:$0xff]
    %v163 = vld [vmem:[#allocation2 + $0xb0] sm:$0xff]
    %v164 = vld [vmem:[#allocation2 + $0xb8] sm:$0xff]
    %v165 = vld [vmem:[#allocation2 + $0xc0] sm:$0xff]
    %v166 = vld [vmem:[#allocation2 + $0xc8] sm:$0xff]
    %v167 = vld [vmem:[#allocation2 + $0xd0] sm:$0xff]
    %v168 = vld [vmem:[#allocation2 + $0xd8] sm:$0xff]
    %v169 = vld [vmem:[#allocation2 + $0xe0] sm:$0xff]
    %v170 = vld [vmem:[#allocation2 + $0xe8] sm:$0xff]
    %v171 = vld [vmem:[#allocation2 + $0xf0] sm:$0xff]
    %v172 = vld [vmem:[#allocation2 + $0xf8] sm:$0xff]
    %v173 = vld [vmem:[%s55] sm:$0xff]
    %v174 = vld [vmem:[%s55 + $0x8] sm:$0xff]
    %v175 = vld [vmem:[%s55 + $0x10] sm:$0xff]
    %v176 = vld [vmem:[%s55 + $0x18] sm:$0xff]
    %v177 = vld [vmem:[%s55 + $0x20] sm:$0xff]
    %v178 = vld [vmem:[%s55 + $0x28] sm:$0xff]
    %v179 = vld [vmem:[%s55 + $0x30] sm:$0xff]
    %v180 = vld [vmem:[%s55 + $0x38] sm:$0xff]
    %v181 = vld [vmem:[%s55 + $0x40] sm:$0xff]
    %v182 = vld [vmem:[%s55 + $0x48] sm:$0xff]
    %v183 = vld [vmem:[%s55 + $0x50] sm:$0xff]
    %v184 = vld [vmem:[%s55 + $0x58] sm:$0xff]
    %v185 = vld [vmem:[%s55 + $0x60] sm:$0xff]
    %v186 = vld [vmem:[%s55 + $0x68] sm:$0xff]
    %v187 = vld [vmem:[%s55 + $0x70] sm:$0xff]
    %v188 = vld [vmem:[%s55 + $0x78] sm:$0xff]
    %v189 = vld [vmem:[%s55 + $0x80] sm:$0xff]
    %v190 = vld [vmem:[%s55 + $0x88] sm:$0xff]
    %v191 = vld [vmem:[%s55 + $0x90] sm:$0xff]
    %v192 = vld [vmem:[%s55 + $0x98] sm:$0xff]
    %v193 = vld [vmem:[%s55 + $0xa0] sm:$0xff]
    %v194 = vld [vmem:[%s55 + $0xa8] sm:$0xff]
    %v195 = vld [vmem:[%s55 + $0xb0] sm:$0xff]
    %v196 = vld [vmem:[%s55 + $0xb8] sm:$0xff]
    %v197 = vld [vmem:[%s55 + $0xc0] sm:$0xff]
    %v198 = vld [vmem:[%s55 + $0xc8] sm:$0xff]
    %v199 = vld [vmem:[%s55 + $0xd0] sm:$0xff]
    %v200 = vld [vmem:[%s55 + $0xd8] sm:$0xff]
    %v201 = vld [vmem:[%s55 + $0xe0] sm:$0xff]
    %v202 = vld [vmem:[%s55 + $0xe8] sm:$0xff]
    %v203 = vld [vmem:[%s55 + $0xf0] sm:$0xff]
    %v204 = vld [vmem:[%s55 + $0xf8] sm:$0xff]
    %v205 = vunpack.c.l.bf16 %v173
    %v206 = vunpack.c.h.bf16 %v173
    %v207 = vunpack.c.l.bf16 %v174
    %v208 = vunpack.c.h.bf16 %v174
    %v209 = vunpack.c.l.bf16 %v175
    %v210 = vunpack.c.h.bf16 %v175
    %v211 = vunpack.c.l.bf16 %v176
    %v212 = vunpack.c.h.bf16 %v176
    %v213 = vunpack.c.l.bf16 %v177
    %v214 = vunpack.c.h.bf16 %v177
    %v215 = vunpack.c.l.bf16 %v178
    %v216 = vunpack.c.h.bf16 %v178
    %v217 = vunpack.c.l.bf16 %v179
    %v218 = vunpack.c.h.bf16 %v179
    %v219 = vunpack.c.l.bf16 %v180
    %v220 = vunpack.c.h.bf16 %v180
    %v221 = vunpack.c.l.bf16 %v181
    %v222 = vunpack.c.h.bf16 %v181
    %v223 = vunpack.c.l.bf16 %v182
    %v224 = vunpack.c.h.bf16 %v182
    %v225 = vunpack.c.l.bf16 %v183
    %v226 = vunpack.c.h.bf16 %v183
    %v227 = vunpack.c.l.bf16 %v184
    %v228 = vunpack.c.h.bf16 %v184
    %v229 = vunpack.c.l.bf16 %v185
    %v230 = vunpack.c.h.bf16 %v185
    %v231 = vunpack.c.l.bf16 %v186
    %v232 = vunpack.c.h.bf16 %v186
    %v233 = vunpack.c.l.bf16 %v187
    %v234 = vunpack.c.h.bf16 %v187
    %v235 = vunpack.c.l.bf16 %v188
    %v236 = vunpack.c.h.bf16 %v188
    %v237 = vunpack.c.l.bf16 %v189
    %v238 = vunpack.c.h.bf16 %v189
    %v239 = vunpack.c.l.bf16 %v190
    %v240 = vunpack.c.h.bf16 %v190
    %v241 = vunpack.c.l.bf16 %v191
    %v242 = vunpack.c.h.bf16 %v191
    %v243 = vunpack.c.l.bf16 %v192
    %v244 = vunpack.c.h.bf16 %v192
    %v245 = vunpack.c.l.bf16 %v193
    %v246 = vunpack.c.h.bf16 %v193
    %v247 = vunpack.c.l.bf16 %v194
    %v248 = vunpack.c.h.bf16 %v194
    %v249 = vunpack.c.l.bf16 %v195
    %v250 = vunpack.c.h.bf16 %v195
    %v251 = vunpack.c.l.bf16 %v196
    %v252 = vunpack.c.h.bf16 %v196
    %v253 = vunpack.c.l.bf16 %v197
    %v254 = vunpack.c.h.bf16 %v197
    %v255 = vunpack.c.l.bf16 %v198
    %v256 = vunpack.c.h.bf16 %v198
    %v257 = vunpack.c.l.bf16 %v199
    %v258 = vunpack.c.h.bf16 %v199
    %v259 = vunpack.c.l.bf16 %v200
    %v260 = vunpack.c.h.bf16 %v200
    %v261 = vunpack.c.l.bf16 %v201
    %v262 = vunpack.c.h.bf16 %v201
    %v263 = vunpack.c.l.bf16 %v202
    %v264 = vunpack.c.h.bf16 %v202
    %v265 = vunpack.c.l.bf16 %v203
    %v266 = vunpack.c.h.bf16 %v203
    %v267 = vunpack.c.l.bf16 %v204
    %v268 = vunpack.c.h.bf16 %v204
    %269 = vmatprep.subr.mxu0 0.0
    %270 = vmatpush1.msra.mxu0 %v109
    %271 = vmatprep.subr.mxu0 0.0
    %272 = vmatpush1.msra.mxu0 %v110
    %273 = vmatprep.subr.mxu0 0.0
    %274 = vmatpush1.msra.mxu0 %v111
    %275 = vmatprep.subr.mxu0 0.0
    %276 = vmatpush1.msra.mxu0 %v112
    %277 = vmatprep.subr.mxu0 0.0
    %278 = vmatpush1.msra.mxu0 %v113
    %279 = vmatprep.subr.mxu0 0.0
    %280 = vmatpush1.msra.mxu0 %v114
    %281 = vmatprep.subr.mxu0 0.0
    %282 = vmatpush1.msra.mxu0 %v115
    %283 = vmatprep.subr.mxu0 0.0
    %284 = vmatpush1.msra.mxu0 %v116
    %285 = vmatprep.subr.mxu0 0.0
    %286 = vmatpush1.msra.mxu0 %v117
    %287 = vmatprep.subr.mxu0 0.0
    %288 = vmatpush1.msra.mxu0 %v118
    %289 = vmatprep.subr.mxu0 0.0
    %290 = vmatpush1.msra.mxu0 %v119
    %291 = vmatprep.subr.mxu0 0.0
    %292 = vmatpush1.msra.mxu0 %v120
    %293 = vmatprep.subr.mxu0 0.0
    %294 = vmatpush1.msra.mxu0 %v121
    %295 = vmatprep.subr.mxu0 0.0
    %296 = vmatpush1.msra.mxu0 %v122
    %297 = vmatprep.subr.mxu0 0.0
    %298 = vmatpush1.msra.mxu0 %v123
    %299 = vmatprep.subr.mxu0 0.0
    %300 = vmatpush1.msra.mxu0 %v124
    %301 = vmatprep.subr.mxu0 0.0
    %302 = vmatpush1.msra.mxu0 %v125
    %303 = vmatprep.subr.mxu0 0.0
    %304 = vmatpush1.msra.mxu0 %v126
    %305 = vmatprep.subr.mxu0 0.0
    %306 = vmatpush1.msra.mxu0 %v127
    %307 = vmatprep.subr.mxu0 0.0
    %308 = vmatpush1.msra.mxu0 %v128
    %309 = vmatprep.subr.mxu0 0.0
    %310 = vmatpush1.msra.mxu0 %v129
    %311 = vmatprep.subr.mxu0 0.0
    %312 = vmatpush1.msra.mxu0 %v130
    %313 = vmatprep.subr.mxu0 0.0
    %314 = vmatpush1.msra.mxu0 %v131
    %315 = vmatprep.subr.mxu0 0.0
    %316 = vmatpush1.msra.mxu0 %v132
    %317 = vmatprep.subr.mxu0 0.0
    %318 = vmatpush1.msra.mxu0 %v133
    %319 = vmatprep.subr.mxu0 0.0
    %320 = vmatpush1.msra.mxu0 %v134
    %321 = vmatprep.subr.mxu0 0.0
    %322 = vmatpush1.msra.mxu0 %v135
    %323 = vmatprep.subr.mxu0 0.0
    %324 = vmatpush1.msra.mxu0 %v136
    %325 = vmatprep.subr.mxu0 0.0
    %326 = vmatpush1.msra.mxu0 %v137
    %327 = vmatprep.subr.mxu0 0.0
    %328 = vmatpush1.msra.mxu0 %v138
    %329 = vmatprep.subr.mxu0 0.0
    %330 = vmatpush1.msra.mxu0 %v139
    %331 = vmatprep.subr.mxu0 0.0
    %332 = vmatpush1.msra.mxu0 %v140
    %333 = vmatprep.mubr.f32.mxu0 %v206
    %334 = vmatmul.mubr.f32.gmra.mrb[0].mxu0 %v205
    %v335 = vpop.f32.mrb[0].mxu0
    %v336 = vadd.f32 0.0, %v335
    %v337 = vpop.f32.mrb[0].mxu0
    %338 = vmatprep.mubr.f32.mxu0 %v208
    %339 = vmatmul.mubr.f32.gmra.mrb[0].mxu0 %v207
    %v340 = vpop.f32.mrb[0].mxu0
    %v341 = vadd.f32 0.0, %v340
    %v342 = vpop.f32.mrb[0].mxu0
    %343 = vmatprep.mubr.f32.mxu0 %v210
    %344 = vmatmul.mubr.f32.gmra.mrb[0].mxu0 %v209
    %v345 = vpop.f32.mrb[0].mxu0
    %v346 = vadd.f32 0.0, %v345
    %v347 = vpop.f32.mrb[0].mxu0
    %348 = vmatprep.mubr.f32.mxu0 %v212
    %349 = vmatmul.mubr.f32.gmra.mrb[0].mxu0 %v211
    %v350 = vpop.f32.mrb[0].mxu0
    %v351 = vadd.f32 0.0, %v350
    %v352 = vpop.f32.mrb[0].mxu0
    %353 = vmatprep.mubr.f32.mxu0 %v214
    %354 = vmatmul.mubr.f32.gmra.mrb[0].mxu0 %v213
    %v355 = vpop.f32.mrb[0].mxu0
    %v356 = vadd.f32 0.0, %v355
    %v357 = vpop.f32.mrb[0].mxu0
    %358 = vmatprep.mubr.f32.mxu0 %v216
    %359 = vmatmul.mubr.f32.gmra.mrb[0].mxu0 %v215
    %v360 = vpop.f32.mrb[0].mxu0
    %v361 = vadd.f32 0.0, %v360
    %v362 = vpop.f32.mrb[0].mxu0
    %363 = vmatprep.mubr.f32.mxu0 %v218
    %364 = vmatmul.mubr.f32.gmra.mrb[0].mxu0 %v217
    %v365 = vpop.f32.mrb[0].mxu0
    %v366 = vadd.f32 0.0, %v365
    %v367 = vpop.f32.mrb[0].mxu0
    %368 = vmatprep.mubr.f32.mxu0 %v220
    %369 = vmatmul.mubr.f32.gmra.mrb[0].mxu0 %v219
    %v370 = vpop.f32.mrb[0].mxu0
    %v371 = vadd.f32 0.0, %v370
    %v372 = vpop.f32.mrb[0].mxu0
    %373 = vmatprep.mubr.f32.mxu0 %v222
    %374 = vmatmul.mubr.f32.gmra.mrb[0].mxu0 %v221
    %v375 = vpop.f32.mrb[0].mxu0
    %v376 = vadd.f32 0.0, %v375
    %v377 = vpop.f32.mrb[0].mxu0
    %378 = vmatprep.mubr.f32.mxu0 %v224
    %379 = vmatmul.mubr.f32.gmra.mrb[0].mxu0 %v223
    %v380 = vpop.f32.mrb[0].mxu0
    %v381 = vadd.f32 0.0, %v380
    %v382 = vpop.f32.mrb[0].mxu0
    %383 = vmatprep.mubr.f32.mxu0 %v226
    %384 = vmatmul.mubr.f32.gmra.mrb[0].mxu0 %v225
    %v385 = vpop.f32.mrb[0].mxu0
    %v386 = vadd.f32 0.0, %v385
    %v387 = vpop.f32.mrb[0].mxu0
    %388 = vmatprep.mubr.f32.mxu0 %v228
    %389 = vmatmul.mubr.f32.gmra.mrb[0].mxu0 %v227
    %v390 = vpop.f32.mrb[0].mxu0
    %v391 = vadd.f32 0.0, %v390
    %v392 = vpop.f32.mrb[0].mxu0
    %393 = vmatprep.mubr.f32.mxu0 %v230
    %394 = vmatmul.mubr.f32.gmra.mrb[0].mxu0 %v229
    %v395 = vpop.f32.mrb[0].mxu0
    %v396 = vadd.f32 0.0, %v395
    %v397 = vpop.f32.mrb[0].mxu0
    %398 = vmatprep.mubr.f32.mxu0 %v232
    %399 = vmatmul.mubr.f32.gmra.mrb[0].mxu0 %v231
    %v400 = vpop.f32.mrb[0].mxu0
    %v401 = vadd.f32 0.0, %v400
    %v402 = vpop.f32.mrb[0].mxu0
    %403 = vmatprep.mubr.f32.mxu0 %v234
    %404 = vmatmul.mubr.f32.gmra.mrb[0].mxu0 %v233
    %v405 = vpop.f32.mrb[0].mxu0
    %v406 = vadd.f32 0.0, %v405
    %v407 = vpop.f32.mrb[0].mxu0
    %408 = vmatprep.mubr.f32.mxu0 %v236
    %409 = vmatmul.mubr.f32.gmra.mrb[0].mxu0 %v235
    %v410 = vpop.f32.mrb[0].mxu0
    %v411 = vadd.f32 0.0, %v410
    %v412 = vpop.f32.mrb[0].mxu0
    %413 = vmatprep.mubr.f32.mxu0 %v238
    %414 = vmatmul.mubr.f32.gmra.mrb[0].mxu0 %v237
    %v415 = vpop.f32.mrb[0].mxu0
    %v416 = vadd.f32 0.0, %v415
    %v417 = vpop.f32.mrb[0].mxu0
    %418 = vmatprep.mubr.f32.mxu0 %v240
    %419 = vmatmul.mubr.f32.gmra.mrb[0].mxu0 %v239
    %v420 = vpop.f32.mrb[0].mxu0
    %v421 = vadd.f32 0.0, %v420
    %v422 = vpop.f32.mrb[0].mxu0
    %423 = vmatprep.mubr.f32.mxu0 %v242
    %424 = vmatmul.mubr.f32.gmra.mrb[0].mxu0 %v241
    %v425 = vpop.f32.mrb[0].mxu0
    %v426 = vadd.f32 0.0, %v425
    %v427 = vpop.f32.mrb[0].mxu0
    %428 = vmatprep.mubr.f32.mxu0 %v244
    %429 = vmatmul.mubr.f32.gmra.mrb[0].mxu0 %v243
    %v430 = vpop.f32.mrb[0].mxu0
    %v431 = vadd.f32 0.0, %v430
    %v432 = vpop.f32.mrb[0].mxu0
    %433 = vmatprep.mubr.f32.mxu0 %v246
    %434 = vmatmul.mubr.f32.gmra.mrb[0].mxu0 %v245
    %v435 = vpop.f32.mrb[0].mxu0
    %v436 = vadd.f32 0.0, %v435
    %v437 = vpop.f32.mrb[0].mxu0
    %438 = vmatprep.mubr.f32.mxu0 %v248
    %439 = vmatmul.mubr.f32.gmra.mrb[0].mxu0 %v247
    %v440 = vpop.f32.mrb[0].mxu0
    %v441 = vadd.f32 0.0, %v440
    %v442 = vpop.f32.mrb[0].mxu0
    %443 = vmatprep.mubr.f32.mxu0 %v250
    %444 = vmatmul.mubr.f32.gmra.mrb[0].mxu0 %v249
    %v445 = vpop.f32.mrb[0].mxu0
    %v446 = vadd.f32 0.0, %v445
    %v447 = vpop.f32.mrb[0].mxu0
    %448 = vmatprep.mubr.f32.mxu0 %v252
    %449 = vmatmul.mubr.f32.gmra.mrb[0].mxu0 %v251
    %v450 = vpop.f32.mrb[0].mxu0
    %v451 = vadd.f32 0.0, %v450
    %v452 = vpop.f32.mrb[0].mxu0
    %453 = vmatprep.mubr.f32.mxu0 %v254
    %454 = vmatmul.mubr.f32.gmra.mrb[0].mxu0 %v253
    %v455 = vpop.f32.mrb[0].mxu0
    %v456 = vadd.f32 0.0, %v455
    %v457 = vpop.f32.mrb[0].mxu0
    %458 = vmatprep.mubr.f32.mxu0 %v256
    %459 = vmatmul.mubr.f32.gmra.mrb[0].mxu0 %v255
    %v460 = vpop.f32.mrb[0].mxu0
    %v461 = vadd.f32 0.0, %v460
    %v462 = vpop.f32.mrb[0].mxu0
    %463 = vmatprep.mubr.f32.mxu0 %v258
    %464 = vmatmul.mubr.f32.gmra.mrb[0].mxu0 %v257
    %v465 = vpop.f32.mrb[0].mxu0
    %v466 = vadd.f32 0.0, %v465
    %v467 = vpop.f32.mrb[0].mxu0
    %468 = vmatprep.mubr.f32.mxu0 %v260
    %469 = vmatmul.mubr.f32.gmra.mrb[0].mxu0 %v259
    %v470 = vpop.f32.mrb[0].mxu0
    %v471 = vadd.f32 0.0, %v470
    %v472 = vpop.f32.mrb[0].mxu0
    %473 = vmatprep.mubr.f32.mxu0 %v262
    %474 = vmatmul.mubr.f32.gmra.mrb[0].mxu0 %v261
    %v475 = vpop.f32.mrb[0].mxu0
    %v476 = vadd.f32 0.0, %v475
    %v477 = vpop.f32.mrb[0].mxu0
    %478 = vmatprep.mubr.f32.mxu0 %v264
    %479 = vmatmul.mubr.f32.gmra.mrb[0].mxu0 %v263
    %v480 = vpop.f32.mrb[0].mxu0
    %v481 = vadd.f32 0.0, %v480
    %v482 = vpop.f32.mrb[0].mxu0
    %483 = vmatprep.mubr.f32.mxu0 %v266
    %484 = vmatmul.mubr.f32.gmra.mrb[0].mxu0 %v265
    %v485 = vpop.f32.mrb[0].mxu0
    %v486 = vadd.f32 0.0, %v485
    %v487 = vpop.f32.mrb[0].mxu0
    %488 = vmatprep.mubr.f32.mxu0 %v268
    %489 = vmatmul.mubr.f32.gmra.mrb[0].mxu0 %v267
    %v490 = vpop.f32.mrb[0].mxu0
    %v491 = vadd.f32 0.0, %v490
    %v492 = vpop.f32.mrb[0].mxu0
    %493 = vdwg.mxu0
    %v494 = vadd.f32 %v141, %v336
    %v495 = vadd.f32 %v142, %v341
    %v496 = vadd.f32 %v143, %v346
    %v497 = vadd.f32 %v144, %v351
    %v498 = vadd.f32 %v145, %v356
    %v499 = vadd.f32 %v146, %v361
    %v500 = vadd.f32 %v147, %v366
    %v501 = vadd.f32 %v148, %v371
    %v502 = vadd.f32 %v149, %v376
    %v503 = vadd.f32 %v150, %v381
    %v504 = vadd.f32 %v151, %v386
    %v505 = vadd.f32 %v152, %v391
    %v506 = vadd.f32 %v153, %v396
    %v507 = vadd.f32 %v154, %v401
    %v508 = vadd.f32 %v155, %v406
    %v509 = vadd.f32 %v156, %v411
    %v510 = vadd.f32 %v157, %v416
    %v511 = vadd.f32 %v158, %v421
    %v512 = vadd.f32 %v159, %v426
    %v513 = vadd.f32 %v160, %v431
    %v514 = vadd.f32 %v161, %v436
    %v515 = vadd.f32 %v162, %v441
    %v516 = vadd.f32 %v163, %v446
    %v517 = vadd.f32 %v164, %v451
    %v518 = vadd.f32 %v165, %v456
    %v519 = vadd.f32 %v166, %v461
    %v520 = vadd.f32 %v167, %v466
    %v521 = vadd.f32 %v168, %v471
    %v522 = vadd.f32 %v169, %v476
    %v523 = vadd.f32 %v170, %v481
    %v524 = vadd.f32 %v171, %v486
    %v525 = vadd.f32 %v172, %v491
    %vm526 = vcmask 261120
    %527 = vst.msk [vmem:[#allocation2] sm:$0xff] %vm526, %v494
    %528 = vst.msk [vmem:[#allocation2 + $0x8] sm:$0xff] %vm526, %v495
    %529 = vst.msk [vmem:[#allocation2 + $0x10] sm:$0xff] %vm526, %v496
    %530 = vst.msk [vmem:[#allocation2 + $0x18] sm:$0xff] %vm526, %v497
    %531 = vst.msk [vmem:[#allocation2 + $0x20] sm:$0xff] %vm526, %v498
    %532 = vst.msk [vmem:[#allocation2 + $0x28] sm:$0xff] %vm526, %v499
    %533 = vst.msk [vmem:[#allocation2 + $0x30] sm:$0xff] %vm526, %v500
    %534 = vst.msk [vmem:[#allocation2 + $0x38] sm:$0xff] %vm526, %v501
    %535 = vst.msk [vmem:[#allocation2 + $0x40] sm:$0xff] %vm526, %v502
    %536 = vst.msk [vmem:[#allocation2 + $0x48] sm:$0xff] %vm526, %v503
    %537 = vst.msk [vmem:[#allocation2 + $0x50] sm:$0xff] %vm526, %v504
    %538 = vst.msk [vmem:[#allocation2 + $0x58] sm:$0xff] %vm526, %v505
    %539 = vst.msk [vmem:[#allocation2 + $0x60] sm:$0xff] %vm526, %v506
    %540 = vst.msk [vmem:[#allocation2 + $0x68] sm:$0xff] %vm526, %v507
    %541 = vst.msk [vmem:[#allocation2 + $0x70] sm:$0xff] %vm526, %v508
    %542 = vst.msk [vmem:[#allocation2 + $0x78] sm:$0xff] %vm526, %v509
    %543 = vst.msk [vmem:[#allocation2 + $0x80] sm:$0xff] %vm526, %v510
    %544 = vst.msk [vmem:[#allocation2 + $0x88] sm:$0xff] %vm526, %v511
    %545 = vst.msk [vmem:[#allocation2 + $0x90] sm:$0xff] %vm526, %v512
    %546 = vst.msk [vmem:[#allocation2 + $0x98] sm:$0xff] %vm526, %v513
    %547 = vst.msk [vmem:[#allocation2 + $0xa0] sm:$0xff] %vm526, %v514
    %548 = vst.msk [vmem:[#allocation2 + $0xa8] sm:$0xff] %vm526, %v515
    %549 = vst.msk [vmem:[#allocation2 + $0xb0] sm:$0xff] %vm526, %v516
    %550 = vst.msk [vmem:[#allocation2 + $0xb8] sm:$0xff] %vm526, %v517
    %551 = vst.msk [vmem:[#allocation2 + $0xc0] sm:$0xff] %vm526, %v518
    %552 = vst.msk [vmem:[#allocation2 + $0xc8] sm:$0xff] %vm526, %v519
    %553 = vst.msk [vmem:[#allocation2 + $0xd0] sm:$0xff] %vm526, %v520
    %554 = vst.msk [vmem:[#allocation2 + $0xd8] sm:$0xff] %vm526, %v521
    %555 = vst.msk [vmem:[#allocation2 + $0xe0] sm:$0xff] %vm526, %v522
    %556 = vst.msk [vmem:[#allocation2 + $0xe8] sm:$0xff] %vm526, %v523
    %557 = vst.msk [vmem:[#allocation2 + $0xf0] sm:$0xff] %vm526, %v524
    %558 = vst.msk [vmem:[#allocation2 + $0xf8] sm:$0xff] %vm526, %v525
  $region29: #{chebnet_forward.3} parent=0 // pred_fallthru
    _
  // Predicated region
  $region30: #{chebnet_forward.3} parent=0 // pred_check
    %p559 = pneg %p61
  $region31: #{chebnet_forward.3} parent=0 // pred_check_branch
    %561 = sbr.rel (%p559) target = $region33
  $region32: #{chebnet_forward.3} parent=0 // pred_region
    %v562 = vld [vmem:[%s4] sm:$0xff]
    %v563 = vld [vmem:[%s4 + $0x8] sm:$0xff]
    %v564 = vld [vmem:[%s4 + $0x10] sm:$0xff]
    %v565 = vld [vmem:[%s4 + $0x18] sm:$0xff]
    %v566 = vld [vmem:[%s4 + $0x20] sm:$0xff]
    %v567 = vld [vmem:[%s4 + $0x28] sm:$0xff]
    %v568 = vld [vmem:[%s4 + $0x30] sm:$0xff]
    %v569 = vld [vmem:[%s4 + $0x38] sm:$0xff]
    %v570 = vld [vmem:[%s4 + $0x40] sm:$0xff]
    %v571 = vld [vmem:[%s4 + $0x48] sm:$0xff]
    %v572 = vld [vmem:[%s4 + $0x50] sm:$0xff]
    %v573 = vld [vmem:[%s4 + $0x58] sm:$0xff]
    %v574 = vld [vmem:[%s4 + $0x60] sm:$0xff]
    %v575 = vld [vmem:[%s4 + $0x68] sm:$0xff]
    %v576 = vld [vmem:[%s4 + $0x70] sm:$0xff]
    %v577 = vld [vmem:[%s4 + $0x78] sm:$0xff]
    %v578 = vld [vmem:[%s4 + $0x80] sm:$0xff]
    %v579 = vld [vmem:[%s4 + $0x88] sm:$0xff]
    %v580 = vld [vmem:[%s4 + $0x90] sm:$0xff]
    %v581 = vld [vmem:[%s4 + $0x98] sm:$0xff]
    %v582 = vld [vmem:[%s4 + $0xa0] sm:$0xff]
    %v583 = vld [vmem:[%s4 + $0xa8] sm:$0xff]
    %v584 = vld [vmem:[%s4 + $0xb0] sm:$0xff]
    %v585 = vld [vmem:[%s4 + $0xb8] sm:$0xff]
    %v586 = vld [vmem:[%s4 + $0xc0] sm:$0xff]
    %v587 = vld [vmem:[%s4 + $0xc8] sm:$0xff]
    %v588 = vld [vmem:[%s4 + $0xd0] sm:$0xff]
    %v589 = vld [vmem:[%s4 + $0xd8] sm:$0xff]
    %v590 = vld [vmem:[%s4 + $0xe0] sm:$0xff]
    %v591 = vld [vmem:[%s4 + $0xe8] sm:$0xff]
    %v592 = vld [vmem:[%s4 + $0xf0] sm:$0xff]
    %v593 = vld [vmem:[%s4 + $0xf8] sm:$0xff]
    %v594 = vld [vmem:[#allocation2] sm:$0xff]
    %v595 = vld [vmem:[#allocation2 + $0x8] sm:$0xff]
    %v596 = vld [vmem:[#allocation2 + $0x10] sm:$0xff]
    %v597 = vld [vmem:[#allocation2 + $0x18] sm:$0xff]
    %v598 = vld [vmem:[#allocation2 + $0x20] sm:$0xff]
    %v599 = vld [vmem:[#allocation2 + $0x28] sm:$0xff]
    %v600 = vld [vmem:[#allocation2 + $0x30] sm:$0xff]
    %v601 = vld [vmem:[#allocation2 + $0x38] sm:$0xff]
    %v602 = vld [vmem:[#allocation2 + $0x40] sm:$0xff]
    %v603 = vld [vmem:[#allocation2 + $0x48] sm:$0xff]
    %v604 = vld [vmem:[#allocation2 + $0x50] sm:$0xff]
    %v605 = vld [vmem:[#allocation2 + $0x58] sm:$0xff]
    %v606 = vld [vmem:[#allocation2 + $0x60] sm:$0xff]
    %v607 = vld [vmem:[#allocation2 + $0x68] sm:$0xff]
    %v608 = vld [vmem:[#allocation2 + $0x70] sm:$0xff]
    %v609 = vld [vmem:[#allocation2 + $0x78] sm:$0xff]
    %v610 = vld [vmem:[#allocation2 + $0x80] sm:$0xff]
    %v611 = vld [vmem:[#allocation2 + $0x88] sm:$0xff]
    %v612 = vld [vmem:[#allocation2 + $0x90] sm:$0xff]
    %v613 = vld [vmem:[#allocation2 + $0x98] sm:$0xff]
    %v614 = vld [vmem:[#allocation2 + $0xa0] sm:$0xff]
    %v615 = vld [vmem:[#allocation2 + $0xa8] sm:$0xff]
    %v616 = vld [vmem:[#allocation2 + $0xb0] sm:$0xff]
    %v617 = vld [vmem:[#allocation2 + $0xb8] sm:$0xff]
    %v618 = vld [vmem:[#allocation2 + $0xc0] sm:$0xff]
    %v619 = vld [vmem:[#allocation2 + $0xc8] sm:$0xff]
    %v620 = vld [vmem:[#allocation2 + $0xd0] sm:$0xff]
    %v621 = vld [vmem:[#allocation2 + $0xd8] sm:$0xff]
    %v622 = vld [vmem:[#allocation2 + $0xe0] sm:$0xff]
    %v623 = vld [vmem:[#allocation2 + $0xe8] sm:$0xff]
    %v624 = vld [vmem:[#allocation2 + $0xf0] sm:$0xff]
    %v625 = vld [vmem:[#allocation2 + $0xf8] sm:$0xff]
    %v626 = vsub.f32 %v562, %v594
    %v627 = vsub.f32 %v563, %v595
    %v628 = vsub.f32 %v564, %v596
    %v629 = vsub.f32 %v565, %v597
    %v630 = vsub.f32 %v566, %v598
    %v631 = vsub.f32 %v567, %v599
    %v632 = vsub.f32 %v568, %v600
    %v633 = vsub.f32 %v569, %v601
    %v634 = vsub.f32 %v570, %v602
    %v635 = vsub.f32 %v571, %v603
    %v636 = vsub.f32 %v572, %v604
    %v637 = vsub.f32 %v573, %v605
    %v638 = vsub.f32 %v574, %v606
    %v639 = vsub.f32 %v575, %v607
    %v640 = vsub.f32 %v576, %v608
    %v641 = vsub.f32 %v577, %v609
    %v642 = vsub.f32 %v578, %v610
    %v643 = vsub.f32 %v579, %v611
    %v644 = vsub.f32 %v580, %v612
    %v645 = vsub.f32 %v581, %v613
    %v646 = vsub.f32 %v582, %v614
    %v647 = vsub.f32 %v583, %v615
    %v648 = vsub.f32 %v584, %v616
    %v649 = vsub.f32 %v585, %v617
    %v650 = vsub.f32 %v586, %v618
    %v651 = vsub.f32 %v587, %v619
    %v652 = vsub.f32 %v588, %v620
    %v653 = vsub.f32 %v589, %v621
    %v654 = vsub.f32 %v590, %v622
    %v655 = vsub.f32 %v591, %v623
    %v656 = vsub.f32 %v592, %v624
    %v657 = vsub.f32 %v593, %v625
    %v658 = vmax.f32 %v626, 0.0
    %v659 = vmax.f32 %v627, 0.0
    %v660 = vmax.f32 %v628, 0.0
    %v661 = vmax.f32 %v629, 0.0
    %v662 = vmax.f32 %v630, 0.0
    %v663 = vmax.f32 %v631, 0.0
    %v664 = vmax.f32 %v632, 0.0
    %v665 = vmax.f32 %v633, 0.0
    %v666 = vmax.f32 %v634, 0.0
    %v667 = vmax.f32 %v635, 0.0
    %v668 = vmax.f32 %v636, 0.0
    %v669 = vmax.f32 %v637, 0.0
    %v670 = vmax.f32 %v638, 0.0
    %v671 = vmax.f32 %v639, 0.0
    %v672 = vmax.f32 %v640, 0.0
    %v673 = vmax.f32 %v641, 0.0
    %v674 = vmax.f32 %v642, 0.0
    %v675 = vmax.f32 %v643, 0.0
    %v676 = vmax.f32 %v644, 0.0
    %v677 = vmax.f32 %v645, 0.0
    %v678 = vmax.f32 %v646, 0.0
    %v679 = vmax.f32 %v647, 0.0
    %v680 = vmax.f32 %v648, 0.0
    %v681 = vmax.f32 %v649, 0.0
    %v682 = vmax.f32 %v650, 0.0
    %v683 = vmax.f32 %v651, 0.0
    %v684 = vmax.f32 %v652, 0.0
    %v685 = vmax.f32 %v653, 0.0
    %v686 = vmax.f32 %v654, 0.0
    %v687 = vmax.f32 %v655, 0.0
    %v688 = vmax.f32 %v656, 0.0
    %v689 = vmax.f32 %v657, 0.0
    %v690 = vld [vmem:[%s5] sm:$0xff]
    %v691 = vld [vmem:[%s5 + $0x8] sm:$0xff]
    %v692 = vld [vmem:[%s5 + $0x10] sm:$0xff]
    %v693 = vld [vmem:[%s5 + $0x18] sm:$0xff]
    %v694 = vld [vmem:[%s6] sm:$0x1]
    %v696 = vlaneseq
    %v697 = vshrl.u32 %v696, 7
    %v698 = vsub.s32 0, %v697
    %v699 = vrot.slane %v694, %v698
    %vm701 = vcmask 261120
    %v703 = vsel %vm701, %v658, 0
    %v706 = vsel %vm701, %v659, 0
    %v709 = vsel %vm701, %v660, 0
    %v712 = vsel %vm701, %v661, 0
    %v715 = vsel %vm701, %v662, 0
    %v718 = vsel %vm701, %v663, 0
    %v721 = vsel %vm701, %v664, 0
    %v724 = vsel %vm701, %v665, 0
    %v727 = vsel %vm701, %v666, 0
    %v730 = vsel %vm701, %v667, 0
    %v733 = vsel %vm701, %v668, 0
    %v736 = vsel %vm701, %v669, 0
    %v739 = vsel %vm701, %v670, 0
    %v742 = vsel %vm701, %v671, 0
    %v745 = vsel %vm701, %v672, 0
    %v748 = vsel %vm701, %v673, 0
    %v751 = vsel %vm701, %v674, 0
    %v754 = vsel %vm701, %v675, 0
    %v757 = vsel %vm701, %v676, 0
    %v760 = vsel %vm701, %v677, 0
    %v763 = vsel %vm701, %v678, 0
    %v766 = vsel %vm701, %v679, 0
    %v769 = vsel %vm701, %v680, 0
    %v772 = vsel %vm701, %v681, 0
    %v775 = vsel %vm701, %v682, 0
    %v778 = vsel %vm701, %v683, 0
    %v781 = vsel %vm701, %v684, 0
    %v784 = vsel %vm701, %v685, 0
    %v787 = vsel %vm701, %v686, 0
    %v790 = vsel %vm701, %v687, 0
    %v793 = vsel %vm701, %v688, 0
    %v796 = vsel %vm701, %v689, 0
    %798 = vmatprep.subr.mxu0 0.0
    %799 = vmatpush1.msra.mxu0 %v690
    %800 = vmatprep.subr.mxu0 0.0
    %801 = vmatpush1.msra.mxu0 %v691
    %802 = vmatprep.subr.mxu0 0.0
    %803 = vmatpush1.msra.mxu0 %v692
    %804 = vmatprep.subr.mxu0 0.0
    %805 = vmatpush1.msra.mxu0 %v693
    %806 = vmatprep.subr.mxu0 0.0
    %807 = vmatpush1.msra.mxu0 0.0
    %808 = vmatprep.subr.mxu0 0.0
    %809 = vmatpush1.msra.mxu0 0.0
    %810 = vmatprep.subr.mxu0 0.0
    %811 = vmatpush1.msra.mxu0 0.0
    %812 = vmatprep.subr.mxu0 0.0
    %813 = vmatpush1.msra.mxu0 0.0
    %814 = vmatprep.subr.mxu0 0.0
    %815 = vmatpush1.msra.mxu0 0.0
    %816 = vmatprep.subr.mxu0 0.0
    %817 = vmatpush1.msra.mxu0 0.0
    %818 = vmatprep.subr.mxu0 0.0
    %819 = vmatpush1.msra.mxu0 0.0
    %820 = vmatprep.subr.mxu0 0.0
    %821 = vmatpush1.msra.mxu0 0.0
    %822 = vmatprep.subr.mxu0 0.0
    %823 = vmatpush1.msra.mxu0 0.0
    %824 = vmatprep.subr.mxu0 0.0
    %825 = vmatpush1.msra.mxu0 0.0
    %826 = vmatprep.subr.mxu0 0.0
    %827 = vmatpush1.msra.mxu0 0.0
    %828 = vmatprep.subr.mxu0 0.0
    %829 = vmatpush1.msra.mxu0 0.0
    %830 = vmatprep.subr.mxu0 0.0
    %831 = vmatpush1.msra.mxu0 0.0
    %832 = vmatprep.subr.mxu0 0.0
    %833 = vmatpush1.msra.mxu0 0.0
    %834 = vmatprep.subr.mxu0 0.0
    %835 = vmatpush1.msra.mxu0 0.0
    %836 = vmatprep.subr.mxu0 0.0
    %837 = vmatpush1.msra.mxu0 0.0
    %838 = vmatprep.subr.mxu0 0.0
    %839 = vmatpush1.msra.mxu0 0.0
    %840 = vmatprep.subr.mxu0 0.0
    %841 = vmatpush1.msra.mxu0 0.0
    %842 = vmatprep.subr.mxu0 0.0
    %843 = vmatpush1.msra.mxu0 0.0
    %844 = vmatprep.subr.mxu0 0.0
    %845 = vmatpush1.msra.mxu0 0.0
    %846 = vmatprep.subr.mxu0 0.0
    %847 = vmatpush1.msra.mxu0 0.0
    %848 = vmatprep.subr.mxu0 0.0
    %849 = vmatpush1.msra.mxu0 0.0
    %850 = vmatprep.subr.mxu0 0.0
    %851 = vmatpush1.msra.mxu0 0.0
    %852 = vmatprep.subr.mxu0 0.0
    %853 = vmatpush1.msra.mxu0 0.0
    %854 = vmatprep.subr.mxu0 0.0
    %855 = vmatpush1.msra.mxu0 0.0
    %856 = vmatprep.subr.mxu0 0.0
    %857 = vmatpush1.msra.mxu0 0.0
    %858 = vmatprep.subr.mxu0 0.0
    %859 = vmatpush1.msra.mxu0 0.0
    %860 = vmatprep.subr.mxu0 0.0
    %861 = vmatpush1.msra.mxu0 0.0
    %862 = vmatprep.mubr.f32.mxu0 0.0
    %863 = vmatmul.mubr.f32.gmra.mrb[0].mxu0 %v703
    %v864 = vpop.f32.mrb[0].mxu0
    %v865 = vadd.f32 %v699, %v864
    %v866 = vpop.f32.mrb[0].mxu0
    %867 = vmatprep.mubr.f32.mxu0 0.0
    %868 = vmatmul.mubr.f32.gmra.mrb[0].mxu0 %v706
    %v869 = vpop.f32.mrb[0].mxu0
    %v870 = vadd.f32 %v699, %v869
    %v871 = vpop.f32.mrb[0].mxu0
    %872 = vmatprep.mubr.f32.mxu0 0.0
    %873 = vmatmul.mubr.f32.gmra.mrb[0].mxu0 %v709
    %v874 = vpop.f32.mrb[0].mxu0
    %v875 = vadd.f32 %v699, %v874
    %v876 = vpop.f32.mrb[0].mxu0
    %877 = vmatprep.mubr.f32.mxu0 0.0
    %878 = vmatmul.mubr.f32.gmra.mrb[0].mxu0 %v712
    %v879 = vpop.f32.mrb[0].mxu0
    %v880 = vadd.f32 %v699, %v879
    %v881 = vpop.f32.mrb[0].mxu0
    %882 = vmatprep.mubr.f32.mxu0 0.0
    %883 = vmatmul.mubr.f32.gmra.mrb[0].mxu0 %v715
    %v884 = vpop.f32.mrb[0].mxu0
    %v885 = vadd.f32 %v699, %v884
    %v886 = vpop.f32.mrb[0].mxu0
    %887 = vmatprep.mubr.f32.mxu0 0.0
    %888 = vmatmul.mubr.f32.gmra.mrb[0].mxu0 %v718
    %v889 = vpop.f32.mrb[0].mxu0
    %v890 = vadd.f32 %v699, %v889
    %v891 = vpop.f32.mrb[0].mxu0
    %892 = vmatprep.mubr.f32.mxu0 0.0
    %893 = vmatmul.mubr.f32.gmra.mrb[0].mxu0 %v721
    %v894 = vpop.f32.mrb[0].mxu0
    %v895 = vadd.f32 %v699, %v894
    %v896 = vpop.f32.mrb[0].mxu0
    %897 = vmatprep.mubr.f32.mxu0 0.0
    %898 = vmatmul.mubr.f32.gmra.mrb[0].mxu0 %v724
    %v899 = vpop.f32.mrb[0].mxu0
    %v900 = vadd.f32 %v699, %v899
    %v901 = vpop.f32.mrb[0].mxu0
    %902 = vmatprep.mubr.f32.mxu0 0.0
    %903 = vmatmul.mubr.f32.gmra.mrb[0].mxu0 %v727
    %v904 = vpop.f32.mrb[0].mxu0
    %v905 = vadd.f32 %v699, %v904
    %v906 = vpop.f32.mrb[0].mxu0
    %907 = vmatprep.mubr.f32.mxu0 0.0
    %908 = vmatmul.mubr.f32.gmra.mrb[0].mxu0 %v730
    %v909 = vpop.f32.mrb[0].mxu0
    %v910 = vadd.f32 %v699, %v909
    %v911 = vpop.f32.mrb[0].mxu0
    %912 = vmatprep.mubr.f32.mxu0 0.0
    %913 = vmatmul.mubr.f32.gmra.mrb[0].mxu0 %v733
    %v914 = vpop.f32.mrb[0].mxu0
    %v915 = vadd.f32 %v699, %v914
    %v916 = vpop.f32.mrb[0].mxu0
    %917 = vmatprep.mubr.f32.mxu0 0.0
    %918 = vmatmul.mubr.f32.gmra.mrb[0].mxu0 %v736
    %v919 = vpop.f32.mrb[0].mxu0
    %v920 = vadd.f32 %v699, %v919
    %v921 = vpop.f32.mrb[0].mxu0
    %922 = vmatprep.mubr.f32.mxu0 0.0
    %923 = vmatmul.mubr.f32.gmra.mrb[0].mxu0 %v739
    %v924 = vpop.f32.mrb[0].mxu0
    %v925 = vadd.f32 %v699, %v924
    %v926 = vpop.f32.mrb[0].mxu0
    %927 = vmatprep.mubr.f32.mxu0 0.0
    %928 = vmatmul.mubr.f32.gmra.mrb[0].mxu0 %v742
    %v929 = vpop.f32.mrb[0].mxu0
    %v930 = vadd.f32 %v699, %v929
    %v931 = vpop.f32.mrb[0].mxu0
    %932 = vmatprep.mubr.f32.mxu0 0.0
    %933 = vmatmul.mubr.f32.gmra.mrb[0].mxu0 %v745
    %v934 = vpop.f32.mrb[0].mxu0
    %v935 = vadd.f32 %v699, %v934
    %v936 = vpop.f32.mrb[0].mxu0
    %937 = vmatprep.mubr.f32.mxu0 0.0
    %938 = vmatmul.mubr.f32.gmra.mrb[0].mxu0 %v748
    %v939 = vpop.f32.mrb[0].mxu0
    %v940 = vadd.f32 %v699, %v939
    %v941 = vpop.f32.mrb[0].mxu0
    %942 = vmatprep.mubr.f32.mxu0 0.0
    %943 = vmatmul.mubr.f32.gmra.mrb[0].mxu0 %v751
    %v944 = vpop.f32.mrb[0].mxu0
    %v945 = vadd.f32 %v699, %v944
    %v946 = vpop.f32.mrb[0].mxu0
    %947 = vmatprep.mubr.f32.mxu0 0.0
    %948 = vmatmul.mubr.f32.gmra.mrb[0].mxu0 %v754
    %v949 = vpop.f32.mrb[0].mxu0
    %v950 = vadd.f32 %v699, %v949
    %v951 = vpop.f32.mrb[0].mxu0
    %952 = vmatprep.mubr.f32.mxu0 0.0
    %953 = vmatmul.mubr.f32.gmra.mrb[0].mxu0 %v757
    %v954 = vpop.f32.mrb[0].mxu0
    %v955 = vadd.f32 %v699, %v954
    %v956 = vpop.f32.mrb[0].mxu0
    %957 = vmatprep.mubr.f32.mxu0 0.0
    %958 = vmatmul.mubr.f32.gmra.mrb[0].mxu0 %v760
    %v959 = vpop.f32.mrb[0].mxu0
    %v960 = vadd.f32 %v699, %v959
    %v961 = vpop.f32.mrb[0].mxu0
    %962 = vmatprep.mubr.f32.mxu0 0.0
    %963 = vmatmul.mubr.f32.gmra.mrb[0].mxu0 %v763
    %v964 = vpop.f32.mrb[0].mxu0
    %v965 = vadd.f32 %v699, %v964
    %v966 = vpop.f32.mrb[0].mxu0
    %967 = vmatprep.mubr.f32.mxu0 0.0
    %968 = vmatmul.mubr.f32.gmra.mrb[0].mxu0 %v766
    %v969 = vpop.f32.mrb[0].mxu0
    %v970 = vadd.f32 %v699, %v969
    %v971 = vpop.f32.mrb[0].mxu0
    %972 = vmatprep.mubr.f32.mxu0 0.0
    %973 = vmatmul.mubr.f32.gmra.mrb[0].mxu0 %v769
    %v974 = vpop.f32.mrb[0].mxu0
    %v975 = vadd.f32 %v699, %v974
    %v976 = vpop.f32.mrb[0].mxu0
    %977 = vmatprep.mubr.f32.mxu0 0.0
    %978 = vmatmul.mubr.f32.gmra.mrb[0].mxu0 %v772
    %v979 = vpop.f32.mrb[0].mxu0
    %v980 = vadd.f32 %v699, %v979
    %v981 = vpop.f32.mrb[0].mxu0
    %982 = vmatprep.mubr.f32.mxu0 0.0
    %983 = vmatmul.mubr.f32.gmra.mrb[0].mxu0 %v775
    %v984 = vpop.f32.mrb[0].mxu0
    %v985 = vadd.f32 %v699, %v984
    %v986 = vpop.f32.mrb[0].mxu0
    %987 = vmatprep.mubr.f32.mxu0 0.0
    %988 = vmatmul.mubr.f32.gmra.mrb[0].mxu0 %v778
    %v989 = vpop.f32.mrb[0].mxu0
    %v990 = vadd.f32 %v699, %v989
    %v991 = vpop.f32.mrb[0].mxu0
    %992 = vmatprep.mubr.f32.mxu0 0.0
    %993 = vmatmul.mubr.f32.gmra.mrb[0].mxu0 %v781
    %v994 = vpop.f32.mrb[0].mxu0
    %v995 = vadd.f32 %v699, %v994
    %v996 = vpop.f32.mrb[0].mxu0
    %997 = vmatprep.mubr.f32.mxu0 0.0
    %998 = vmatmul.mubr.f32.gmra.mrb[0].mxu0 %v784
    %v999 = vpop.f32.mrb[0].mxu0
    %v1000 = vadd.f32 %v699, %v999
    %v1001 = vpop.f32.mrb[0].mxu0
    %1002 = vmatprep.mubr.f32.mxu0 0.0
    %1003 = vmatmul.mubr.f32.gmra.mrb[0].mxu0 %v787
    %v1004 = vpop.f32.mrb[0].mxu0
    %v1005 = vadd.f32 %v699, %v1004
    %v1006 = vpop.f32.mrb[0].mxu0
    %1007 = vmatprep.mubr.f32.mxu0 0.0
    %1008 = vmatmul.mubr.f32.gmra.mrb[0].mxu0 %v790
    %v1009 = vpop.f32.mrb[0].mxu0
    %v1010 = vadd.f32 %v699, %v1009
    %v1011 = vpop.f32.mrb[0].mxu0
    %1012 = vmatprep.mubr.f32.mxu0 0.0
    %1013 = vmatmul.mubr.f32.gmra.mrb[0].mxu0 %v793
    %v1014 = vpop.f32.mrb[0].mxu0
    %v1015 = vadd.f32 %v699, %v1014
    %v1016 = vpop.f32.mrb[0].mxu0
    %1017 = vmatprep.mubr.f32.mxu0 0.0
    %1018 = vmatmul.mubr.f32.gmra.mrb[0].mxu0 %v796
    %v1019 = vpop.f32.mrb[0].mxu0
    %v1020 = vadd.f32 %v699, %v1019
    %v1021 = vpop.f32.mrb[0].mxu0
    %1022 = vdwg.mxu0
    %vm1023 = vcmask 15360
    %1024 = vst.msk [vmem:[%s7] sm:$0xff] %vm1023, %v865
    %1025 = vst.msk [vmem:[%s7 + $0x8] sm:$0xff] %vm1023, %v870
    %1026 = vst.msk [vmem:[%s7 + $0x10] sm:$0xff] %vm1023, %v875
    %1027 = vst.msk [vmem:[%s7 + $0x18] sm:$0xff] %vm1023, %v880
    %1028 = vst.msk [vmem:[%s7 + $0x20] sm:$0xff] %vm1023, %v885
    %1029 = vst.msk [vmem:[%s7 + $0x28] sm:$0xff] %vm1023, %v890
    %1030 = vst.msk [vmem:[%s7 + $0x30] sm:$0xff] %vm1023, %v895
    %1031 = vst.msk [vmem:[%s7 + $0x38] sm:$0xff] %vm1023, %v900
    %1032 = vst.msk [vmem:[%s7 + $0x40] sm:$0xff] %vm1023, %v905
    %1033 = vst.msk [vmem:[%s7 + $0x48] sm:$0xff] %vm1023, %v910
    %1034 = vst.msk [vmem:[%s7 + $0x50] sm:$0xff] %vm1023, %v915
    %1035 = vst.msk [vmem:[%s7 + $0x58] sm:$0xff] %vm1023, %v920
    %1036 = vst.msk [vmem:[%s7 + $0x60] sm:$0xff] %vm1023, %v925
    %1037 = vst.msk [vmem:[%s7 + $0x68] sm:$0xff] %vm1023, %v930
    %1038 = vst.msk [vmem:[%s7 + $0x70] sm:$0xff] %vm1023, %v935
    %1039 = vst.msk [vmem:[%s7 + $0x78] sm:$0xff] %vm1023, %v940
    %1040 = vst.msk [vmem:[%s7 + $0x80] sm:$0xff] %vm1023, %v945
    %1041 = vst.msk [vmem:[%s7 + $0x88] sm:$0xff] %vm1023, %v950
    %1042 = vst.msk [vmem:[%s7 + $0x90] sm:$0xff] %vm1023, %v955
    %1043 = vst.msk [vmem:[%s7 + $0x98] sm:$0xff] %vm1023, %v960
    %1044 = vst.msk [vmem:[%s7 + $0xa0] sm:$0xff] %vm1023, %v965
    %1045 = vst.msk [vmem:[%s7 + $0xa8] sm:$0xff] %vm1023, %v970
    %1046 = vst.msk [vmem:[%s7 + $0xb0] sm:$0xff] %vm1023, %v975
    %1047 = vst.msk [vmem:[%s7 + $0xb8] sm:$0xff] %vm1023, %v980
    %1048 = vst.msk [vmem:[%s7 + $0xc0] sm:$0xff] %vm1023, %v985
    %1049 = vst.msk [vmem:[%s7 + $0xc8] sm:$0xff] %vm1023, %v990
    %1050 = vst.msk [vmem:[%s7 + $0xd0] sm:$0xff] %vm1023, %v995
    %1051 = vst.msk [vmem:[%s7 + $0xd8] sm:$0xff] %vm1023, %v1000
    %1052 = vst.msk [vmem:[%s7 + $0xe0] sm:$0xff] %vm1023, %v1005
    %1053 = vst.msk [vmem:[%s7 + $0xe8] sm:$0xff] %vm1023, %v1010
    %1054 = vst.msk [vmem:[%s7 + $0xf0] sm:$0xff] %vm1023, %v1015
    %1055 = vst.msk [vmem:[%s7 + $0xf8] sm:$0xff] %vm1023, %v1020
  $region33: #{chebnet_forward.3} parent=0 // pred_fallthru
    _
  // Predicated region
  $region34: #{chebnet_forward.3} parent=0 // pred_check
    _
  $region35: #{chebnet_forward.3} parent=0 // pred_check_branch
    %1057 = sbr.rel (0) target = $region37
  $region36: #{chebnet_forward.3} parent=0 // pred_region
    _
  $region37: #{chebnet_forward.3} parent=0 // pred_fallthru
    _
  // Predicated region
  $region38: #{chebnet_forward.3} parent=0 // pred_check
    _
  $region39: #{chebnet_forward.3} parent=0 // pred_check_branch
    %1059 = sbr.rel (0) target = $region41
  $region40: #{chebnet_forward.3} parent=0 // pred_region
    _
  $region41: #{chebnet_forward.3} parent=0 // pred_fallthru
    _

</llo_original>
